<compile_context>
chip_gen: v6e
topology: v6e:2x2x1
jax: 0.10.0
libtpu: 0.0.40
codegen_flags: <defaults>
</compile_context>

<pallas_src>
import numpy as np
import jax
import jax.numpy as jnp
from jax import lax
from jax.experimental import pallas as pl
from jax.experimental.pallas import tpu as pltpu

NEG_SLOPE = 0.01      # F.leaky_relu / nn.LeakyReLU default slope
BN_EPS = 1e-5
LR_COEFF = 1.0        # undefined global `lr_coeff` of the reference


def _leaky(x):
    return jnp.where(x > 0, x, NEG_SLOPE * x)


# ---- tiny symbolic 3x3 helpers: entries are python floats or (N, 1) columns ----

def _is_zero(v):
    return isinstance(v, (int, float)) and float(v) == 0.0


def _mm(Ma, Mb):
    n = len(Ma)
    out = []
    for a in range(n):
        row = []
        for b in range(n):
            acc = None
            for c in range(n):
                u, v = Ma[a][c], Mb[c][b]
                if _is_zero(u) or _is_zero(v):
                    continue
                term = u * v
                acc = term if acc is None else acc + term
            row.append(0.0 if acc is None else acc)
        out.append(row)
    return out


def _matvec(Ma, vec):
    n = len(vec)
    out = []
    for a in range(n):
        acc = None
        for b in range(n):
            u, v = Ma[a][b], vec[b]
            if _is_zero(u) or _is_zero(v):
                continue
            term = u * v
            acc = term if acc is None else acc + term
        out.append(0.0 if acc is None else acc)
    return out


def _axpy(alpha, x, y):
    # alpha * x + y with constant folding
    if _is_zero(x):
        return y
    t = alpha * x
    return t if _is_zero(y) else t + y


def _as_col(v, proto):
    return jnp.full_like(proto, float(v)) if isinstance(v, (int, float)) else v


def _shift_down(a):
    # out[t] = a[t-1]; row 0 holds a copy of a[0] (callers always mask row 0).
    # (pltpu.roll(a, 1, 0) is a drop-in since the wrapped row is masked.)
    return jnp.concatenate([a[:1], a[:-1]], axis=0)


def _shift_up(a):
    # out[t] = a[t+1]; last row holds a copy of a[-1] (callers always mask it).
    return jnp.concatenate([a[1:], a[-1:]], axis=0)


# ----------------------------- fused Pallas kernel ----------------------------

def make_fused_kernel(consts):
    """Build the fused whole-trajectory kernel; Kalman constants are baked in."""
    B = np.asarray(consts['B'], dtype=np.float64)
    C = np.asarray(consts['C'], dtype=np.float64)
    H = np.asarray(consts['H'], dtype=np.float64)
    Qi = np.asarray(consts['Q_inv'], dtype=np.float64)
    Ri = np.asarray(consts['R_inv'], dtype=np.float64)
    HtRi = H.T @ Ri
    dt = float(consts['dt'])
    K = int(consts['K'])
    gamma = float(consts['gamma'])
    ds = Qi.shape[0]

    H_l = [[float(H[a, b]) for b in range(ds)] for a in range(ds)]
    Qi_l = [[float(Qi[a, b]) for b in range(ds)] for a in range(ds)]
    HtRi_l = [[float(HtRi[a, b]) for b in range(ds)] for a in range(ds)]

    def kernel(meas_ref, xinit_ref, h0_ref, hyu_ref,
               whs_ref, wmsg_ref, we2_ref, wnode_ref, wgru_ref,
               wdec1_ref, wdec2_ref, bias_ref, o_ref):
        T = o_ref.shape[0]
        N = meas_ref.shape[0]
        nf = h0_ref.shape[1]

        rowv = lax.broadcasted_iota(jnp.int32, (N, 1), 0)
        first_row = rowv == 0
        last_row = rowv == (N - 1)

        def brow(i, width):                      # one packed bias row
            return bias_ref[i:i + 1, :width]

        def step(t, carry):
            hs, x = carry                        # (N, nf), (N, ds)
            meas = meas_ref[...]
            x_c = [x[:, j:j + 1] for j in range(ds)]
            meas_c = [meas[:, j:j + 1] for j in range(ds)]

            # --- Lorenz Jacobian A_(x_t): entries are constants or (N,1) columns;
            #     structural zeros of B, C folded out at trace time. ---
            A_ = []
            for a in range(ds):
                row = []
                for b in range(ds):
                    acc = None
                    for j in range(ds):
                        coef = float(B[b, a, j])
                        if coef != 0.0:
                            term = coef * x_c[j]
                            acc = term if acc is None else acc + term
                    cval = float(C[a, b])
                    if acc is None:
                        row.append(cval)
                    elif cval != 0.0:
                        row.append(acc + cval)
                    else:
                        row.append(acc)
                A_.append(row)

            # --- Taylor series A = sum_{i<=K} (A_*dt)^i / i!  in Horner form
            #     (one running accumulator -> ~half the live temporaries). ---
            M = [[0.0 if _is_zero(A_[a][b]) else dt * A_[a][b] for b in range(ds)]
                 for a in range(ds)]
            A = [[1.0 if a == b else 0.0 for b in range(ds)] for a in range(ds)]
            for k in range(K, 0, -1):
                prod = _mm(M, A)
                inv = 1.0 / float(k)
                A = [[_axpy(inv, prod[a][b], 1.0 if a == b else 0.0)
                      for b in range(ds)] for a in range(ds)]

            # --- Kalman messages m1/m2/m3 on full-length (N, ds) tiles; shifted
            #     rows that would wrap are masked, so no zero-row padding. ---
            xp1 = _shift_up(x)                               # x_{t+1}
            xp1_c = [xp1[:, j:j + 1] for j in range(ds)]
            Ax = _matvec(A, x_c)
            dv = [xp1_c[a] - Ax[a] for a in range(ds)]
            QC = _matvec(Qi_l, dv)                           # Q_inv (x_{t+1} - A x_t)
            qc_mat = jnp.concatenate([_as_col(QC[a], x_c[0]) for a in range(ds)], axis=1)
            m1 = jnp.where(first_row, 0.0, -_shift_down(qc_mat))
            m3_cols = []
            for a in range(ds):
                acc = None
                for b in range(ds):
                    u, v = A[b][a], QC[b]
                    if _is_zero(u) or _is_zero(v):
                        continue
                    term = u * v
                    acc = term if acc is None else acc + term
                m3_cols.append(_as_col(0.0 if acc is None else acc, x_c[0]))
            m3 = jnp.where(last_row, 0.0, jnp.concatenate(m3_cols, axis=1))
            Hx = _matvec(H_l, x_c)
            resid = [meas_c[a] - Hx[a] for a in range(ds)]
            m2 = jnp.concatenate([_as_col(v, x_c[0]) for v in _matvec(HtRi_l, resid)],
                                 axis=1)
            msum = m1 + m2 + m3                              # (N, ds)

            # --- edge MLPs layer 1: one fused (N,nf)x(nf,5nf) matmul for all
            #     h-dependent terms, one block-diag (N,3ds)x(3ds,3nf) matmul for
            #     the messages; hy contribution precomputed in the wrapper. ---
            hs_big = jnp.dot(hs, whs_ref[...], preferred_element_type=jnp.float32)
            m_cat = jnp.concatenate([m1, m2, m3], axis=1)    # (N, 3*ds)
            msg = jnp.dot(m_cat, wmsg_ref[...], preferred_element_type=jnp.float32)
            a_r = (hs_big[:, 0:nf] + _shift_down(hs_big[:, nf:2 * nf])
                   + msg[:, 0:nf] + brow(0, nf))
            a_u = hs_big[:, 2 * nf:3 * nf] + hyu_ref[...] + msg[:, nf:2 * nf]
            a_l = (hs_big[:, 3 * nf:4 * nf] + _shift_up(hs_big[:, 4 * nf:5 * nf])
                   + msg[:, 2 * nf:3 * nf] + brow(1, nf))
            h1 = _leaky(jnp.concatenate([a_r, a_u, a_l], axis=1))   # (N, 3nf)

            # --- edge MLPs layer 2 fused as a single block-diagonal matmul; the
            #     chain-graph segment-sum becomes masked adds. ---
            f = _leaky(jnp.dot(h1, we2_ref[...], preferred_element_type=jnp.float32)
                       + brow(2, 3 * nf))
            agg = (f[:, nf:2 * nf]
                   + jnp.where(first_row, 0.0, f[:, 0:nf])
                   + jnp.where(last_row, 0.0, f[:, 2 * nf:3 * nf]))

            # --- node_mlp: Linear -> BatchNorm (training batch stats) -> LeakyReLU ---
            a_n = (jnp.dot(agg, wnode_ref[...], preferred_element_type=jnp.float32)
                   + brow(3, nf))
            mu = jnp.mean(a_n, axis=0, keepdims=True)
            var = jnp.mean((a_n - mu) ** 2, axis=0, keepdims=True)
            m = _leaky((a_n - mu) * lax.rsqrt(var + BN_EPS) * brow(4, nf) + brow(5, nf))

            # --- GRUCell: all four gate products in one (N,2nf)x(2nf,4nf) matmul ---
            g = (jnp.dot(jnp.concatenate([m, hs], axis=1), wgru_ref[...],
                         preferred_element_type=jnp.float32) + brow(6, 4 * nf))
            r = jax.nn.sigmoid(g[:, 0:nf])
            z = jax.nn.sigmoid(g[:, nf:2 * nf])
            n_g = jnp.tanh(g[:, 2 * nf:3 * nf] + r * g[:, 3 * nf:4 * nf])
            h_new = (1.0 - z) * n_g + z * hs

            # --- decode: h2state_1 -> Graph_bn -> ReLU -> h2state_2 ---
            y = (jnp.dot(h_new, wdec1_ref[...], preferred_element_type=jnp.float32)
                 + brow(7, nf))
            mu = jnp.mean(y, axis=0, keepdims=True)
            var = jnp.mean((y - mu) ** 2, axis=0, keepdims=True)
            y = jnp.maximum((y - mu) * lax.rsqrt(var + BN_EPS) * brow(8, nf)
                            + brow(9, nf), 0.0)
            grad = (jnp.dot(y, wdec2_ref[...], preferred_element_type=jnp.float32)
                    + brow(10, ds))

            # --- Kalman-style state update; per-step write lands in the VMEM-
            #     resident output slab (single HBM DMA after the loop). ---
            x_new = x + gamma * (grad + LR_COEFF * msum)
            o_ref[t] = x_new
            return (h_new, x_new)

        lax.fori_loop(0, T, step, (h0_ref[...], xinit_ref[...]))

    return kernel


# ------------------------------- JAX glue -------------------------------------

def hybrid_lorenz_forward(params, meas_in, consts, h0, T):
    """Hybrid_lorenz.forward (prior=True, learned=True, init='meas_invariant')."""
    N = meas_in.shape[1]
    nf = h0.shape[1]
    ds = params['dec_w2'].shape[1]

    H = jnp.asarray(consts['H'], jnp.float32)
    meas_rows = meas_in[0].astype(jnp.float32)                    # (N, dm), rows = time
    x_init = jnp.dot(meas_rows, H)                                # row-major H^T @ meas

    # meas2inv (replicate-pad finite differences), row-major (N, 2*dm)
    left = meas_rows - jnp.concatenate([meas_rows[:1], meas_rows[:-1]], axis=0)
    right = jnp.concatenate([meas_rows[1:], meas_rows[-1:]], axis=0) - meas_rows
    meas_inv = jnp.concatenate([left, right], axis=1)

    h0_rows = jnp.transpose(h0[0])                                # (N, nf)

    # step-invariant measurement-node embedding (gnn.init_h), hoisted out of the kernel
    hy = jnp.dot(meas_inv, params['fc_init_w']) + params['fc_init_b']

    wr1, br1, wr2, br2 = params['edge_m_right']
    wu1, bu1, wu2, bu2 = params['edge_m_up']
    wl1, bl1, wl2, bl2 = params['edge_m_left']

    # edge layer-1 weights split (source / target / edge-attr rows) and packed
    w_hs = jnp.concatenate([wr1[:nf], wr1[nf:2 * nf], wu1[:nf],
                            wl1[:nf], wl1[nf:2 * nf]], axis=1)          # (nf, 5nf)
    hy_u = jnp.dot(hy, wu1[nf:2 * nf]) + bu1                            # (N, nf), invariant
    zde = jnp.zeros((ds, nf), jnp.float32)
    w_msg = jnp.concatenate([
        jnp.concatenate([wr1[2 * nf:], zde, zde], axis=1),
        jnp.concatenate([zde, wu1[2 * nf:], zde], axis=1),
        jnp.concatenate([zde, zde, wl1[2 * nf:]], axis=1)], axis=0)     # (3ds, 3nf)
    znn = jnp.zeros((nf, nf), jnp.float32)
    w_e2 = jnp.concatenate([
        jnp.concatenate([wr2, znn, znn], axis=1),
        jnp.concatenate([znn, wu2, znn], axis=1),
        jnp.concatenate([znn, znn, wl2], axis=1)], axis=0)              # (3nf, 3nf)
    b_e2 = jnp.concatenate([br2, bu2, bl2], axis=1)                     # (1, 3nf)

    # fused GRU weight: [m | h] @ [[Wi_r Wi_z Wi_n 0], [Wh_r Wh_z 0 Wh_n]]
    w_gru = jnp.concatenate([
        jnp.concatenate([params['gru_wir'], params['gru_wiz'],
                         params['gru_win'], znn], axis=1),
        jnp.concatenate([params['gru_whr'], params['gru_whz'],
                         znn, params['gru_whn']], axis=1)], axis=0)     # (2nf, 4nf)
    b_gru = jnp.concatenate([params['gru_bir'] + params['gru_bhr'],
                             params['gru_biz'] + params['gru_bhz'],
                             params['gru_bin'], params['gru_bhn']], axis=1)

    BW = max(128, 4 * nf)

    def pad_b(v):
        return jnp.pad(v, ((0, 0), (0, BW - v.shape[1])))

    biases = jnp.concatenate([
        pad_b(br1), pad_b(bl1), pad_b(b_e2),
        pad_b(params['node_b']), pad_b(params['node_bn_g']), pad_b(params['node_bn_b']),
        pad_b(b_gru),
        pad_b(params['dec_b1']), pad_b(params['dec_bn_g']), pad_b(params['dec_bn_b']),
        pad_b(params['dec_b2']),
    ], axis=0)                                                          # (11, BW)

    inputs = [meas_rows, x_init, h0_rows, hy_u,
              w_hs, w_msg, w_e2, params['node_w'], w_gru,
              params['dec_w1'], params['dec_w2'], biases]
    in_specs = [pl.BlockSpec(a.shape, lambda i, nd=a.ndim: (0,) * nd) for a in inputs]

    flops_step = 2 * N * (nf * 5 * nf + 3 * ds * 3 * nf + 3 * nf * 3 * nf
                          + nf * nf + 2 * nf * 4 * nf + nf * nf + nf * ds)
    cost = pl.CostEstimate(
        flops=int(T * flops_step),
        transcendentals=int(T * 3 * N * nf),
        bytes_accessed=int(sum(int(a.size) * a.dtype.itemsize for a in inputs)
                           + T * N * ds * 4))

    kernel = make_fused_kernel(consts)
    # NOTE: the whole (T, N, ds) trajectory stays VMEM-resident (~8 KiB per step
    # after lane padding).  For very long horizons chunk the grid over T instead
    # (keep T*8 KiB well under the scoped VMEM limit, esp. on v7x).
    pos = pl.pallas_call(
        kernel,
        out_shape=jax.ShapeDtypeStruct((T, N, ds), jnp.float32),
        grid_spec=pltpu.PrefetchScalarGridSpec(
            num_scalar_prefetch=0,
            grid=(1,),
            in_specs=in_specs,
            out_specs=pl.BlockSpec((T, N, ds), lambda i: (0, 0, 0))),
        compiler_params=pltpu.CompilerParams(dimension_semantics=("arbitrary",)),
        cost_estimate=cost,
    )(*inputs)

    return pos[:, None, :, :]                                           # (T, 1, N, ds)


# --------------------- pure-JAX reference (numerical smoke test) ---------------

def hybrid_lorenz_reference(params, meas_in, consts, h0, T):
    B = jnp.asarray(consts['B'], jnp.float32)
    C = jnp.asarray(consts['C'], jnp.float32)
    H = jnp.asarray(consts['H'], jnp.float32)
    Qi = jnp.asarray(consts['Q_inv'], jnp.float32)
    Ri = jnp.asarray(consts['R_inv'], jnp.float32)
    dt, K, gamma = float(consts['dt']), int(consts['K']), float(consts['gamma'])
    N = meas_in.shape[1]
    nf = h0.shape[1]
    ds = params['dec_w2'].shape[1]

    meas = meas_in[0].astype(jnp.float32)
    x = meas @ H
    left = meas - jnp.concatenate([meas[:1], meas[:-1]], axis=0)
    right = jnp.concatenate([meas[1:], meas[-1:]], axis=0) - meas
    meas_inv = jnp.concatenate([left, right], axis=1)
    hy = meas_inv @ params['fc_init_w'] + params['fc_init_b']
    h = jnp.transpose(h0[0])

    def bn(v, g, b):
        mu = jnp.mean(v, axis=0, keepdims=True)
        var = jnp.mean((v - mu) ** 2, axis=0, keepdims=True)
        return (v - mu) * lax.rsqrt(var + BN_EPS) * g + b

    def gen_A(xr):
        A_ = jnp.einsum('baj,mj->mab', B, xr) + C[None]
        M_ = A_ * dt
        A = jnp.broadcast_to(jnp.eye(ds, dtype=jnp.float32), M_.shape)
        P = A
        fact = 1.0
        for i in range(1, K + 1):
            P = jnp.einsum('mab,mbc->mac', P, M_)
            fact *= float(i)
            A = A + P / fact
        return A

    wr1, br1, wr2, br2 = params['edge_m_right']
    wu1, bu1, wu2, bu2 = params['edge_m_up']
    wl1, bl1, wl2, bl2 = params['edge_m_left']

    def mlp(inp, w1, b1, w2, b2):
        return _leaky(_leaky(inp @ w1 + b1) @ w2 + b2)

    pos = []
    for _ in range(T):
        A = gen_A(x[:-1])
        qc = jnp.einsum('ab,mb->ma', Qi, x[1:] - jnp.einsum('mab,mb->ma', A, x[:-1]))
        zrow = jnp.zeros((1, ds), jnp.float32)
        m1 = jnp.concatenate([zrow, -qc], axis=0)
        m3 = jnp.concatenate([jnp.einsum('mba,mb->ma', A, qc), zrow], axis=0)
        m2 = (meas - x @ H.T) @ (H.T @ Ri).T

        f_r = mlp(jnp.concatenate([h[1:], h[:-1], m1[1:]], axis=1), wr1, br1, wr2, br2)
        f_u = mlp(jnp.concatenate([h, hy, m2], axis=1), wu1, bu1, wu2, bu2)
        f_l = mlp(jnp.concatenate([h[:-1], h[1:], m3[:-1]], axis=1), wl1, bl1, wl2, bl2)
        zr = jnp.zeros((1, nf), jnp.float32)
        agg = f_u + jnp.concatenate([zr, f_r], axis=0) + jnp.concatenate([f_l, zr], axis=0)

        m_node = _leaky(bn(agg @ params['node_w'] + params['node_b'],
                           params['node_bn_g'], params['node_bn_b']))
        r = jax.nn.sigmoid(m_node @ params['gru_wir'] + params['gru_bir']
                           + h @ params['gru_whr'] + params['gru_bhr'])
        z = jax.nn.sigmoid(m_node @ params['gru_wiz'] + params['gru_biz']
                           + h @ params['gru_whz'] + params['gru_bhz'])
        n = jnp.tanh(m_node @ params['gru_win'] + params['gru_bin']
                     + r * (h @ params['gru_whn'] + params['gru_bhn']))
        h = (1.0 - z) * n + z * h

        y = jnp.maximum(bn(h @ params['dec_w1'] + params['dec_b1'],
                           params['dec_bn_g'], params['dec_bn_b']), 0.0)
        grad = y @ params['dec_w2'] + params['dec_b2']
        x = x + gamma * (grad + LR_COEFF * (m1 + m2 + m3))
        pos.append(x)
    return jnp.stack(pos)[:, None]


# ------------------------------ parameters ------------------------------------

def init_params(key, nf, dim_state, dim_meas):
    keys = iter(jax.random.split(key, 64))

    def nrm(shape, scale=0.1):
        return scale * jax.random.normal(next(keys), shape, dtype=jnp.float32)

    n_in_edge = 2 * nf + dim_state        # hybrid=True -> edge input = [src, tgt, edge_attr]
    p = {}
    p['fc_init_w'] = nrm((2 * dim_meas, nf))          # Conv1d(2*dm, nf, 1), pre-transposed
    p['fc_init_b'] = nrm((1, nf))
    for k in ('m_right', 'm_up', 'm_left'):
        p['edge_' + k] = (nrm((n_in_edge, nf)), nrm((1, nf)), nrm((nf, nf)), nrm((1, nf)))
    p['node_w'] = nrm((nf, nf)); p['node_b'] = nrm((1, nf))
    p['node_bn_g'] = jnp.ones((1, nf), jnp.float32)
    p['node_bn_b'] = jnp.zeros((1, nf), jnp.float32)
    for g in ('r', 'z', 'n'):                          # GRUCell, per-gate weights
        p['gru_wi' + g] = nrm((nf, nf)); p['gru_bi' + g] = nrm((1, nf))
        p['gru_wh' + g] = nrm((nf, nf)); p['gru_bh' + g] = nrm((1, nf))
    p['dec_w1'] = nrm((nf, nf)); p['dec_b1'] = nrm((1, nf))
    p['dec_bn_g'] = jnp.ones((1, nf), jnp.float32)
    p['dec_bn_b'] = jnp.zeros((1, nf), jnp.float32)
    p['dec_w2'] = nrm((nf, dim_state), scale=0.05)    # small xavier-like init
    p['dec_b2'] = 0.02 * (2.0 * jax.random.uniform(next(keys), (1, dim_state)) - 1.0)
    return p


# --------------------------------- main ----------------------------------------

if __name__ == "__main__":
    nf, N = 32, 16
    dim_state, dim_meas = 3, 3
    sigma, lamb, dt, K, gamma, T = 1.0, 1.0, 0.02, 5, 0.05, 4

    key = jax.random.PRNGKey(0)
    kp, km, kh = jax.random.split(key, 3)
    params = init_params(kp, nf, dim_state, dim_meas)

    # meas as passed to forward: (batch, N, dim_meas)
    meas_in = jax.random.normal(km, (1, N, dim_meas), dtype=jnp.float32)
    # torch.randn initial hidden state of gnn.init_h: (1, nf, N)
    h0 = jax.random.normal(kh, (1, nf, N), dtype=jnp.float32)

    # Lorenz model constants (baked into the kernel at build time)
    B_np = np.array([[[0., 0., 0.], [0., 0., -1.], [0., 1., 0.]],
                     [[0., 0., 0.], [0., 0., 0.], [0., 0., 0.]],
                     [[0., 0., 0.], [0., 0., 0.], [0., 0., 0.]]], dtype=np.float32)
    C_np = np.array([[-10., 10., 0.], [28., -1., 0.], [0., 0., -8. / 3.]], dtype=np.float32)
    consts = dict(
        H=np.eye(3, dtype=np.float32),                        # HNL=False, RotateH=False
        R_inv=np.eye(3, dtype=np.float32) / (lamb ** 2),
        Q_inv=np.eye(3, dtype=np.float32) / (sigma ** 2),
        B=B_np, C=C_np, dt=dt, K=K, gamma=gamma,
    )

    fwd = jax.jit(lambda p, m, h: hybrid_lorenz_forward(p, m, consts, h, T))
    out = jax.block_until_ready(fwd(params, meas_in, h0))
    assert out.shape == (T, 1, N, dim_state)
    assert bool(jnp.all(jnp.isfinite(out)))

    # numerical smoke test against the unfused pure-JAX reference
    ref = hybrid_lorenz_reference(params, meas_in, consts, h0, T)
    err = float(jnp.max(jnp.abs(out - ref)))
    assert err < 1e-2, f"kernel/reference mismatch, max abs err = {err}"
    print("KERNEL_OK")
</pallas_src>

<mosaic_0001>
module attributes {stable_mosaic.version = 11 : i64} {
  func.func @kernel(%arg0: i32, %arg1: memref<16x3xf32, #tpu.memory_space<vmem>>, %arg2: memref<16x3xf32, #tpu.memory_space<vmem>>, %arg3: memref<16x32xf32, #tpu.memory_space<vmem>>, %arg4: memref<16x32xf32, #tpu.memory_space<vmem>>, %arg5: memref<32x160xf32, #tpu.memory_space<vmem>>, %arg6: memref<9x96xf32, #tpu.memory_space<vmem>>, %arg7: memref<96x96xf32, #tpu.memory_space<vmem>>, %arg8: memref<32x32xf32, #tpu.memory_space<vmem>>, %arg9: memref<64x128xf32, #tpu.memory_space<vmem>>, %arg10: memref<32x32xf32, #tpu.memory_space<vmem>>, %arg11: memref<32x3xf32, #tpu.memory_space<vmem>>, %arg12: memref<11x128xf32, #tpu.memory_space<vmem>>, %arg13: memref<4x16x3xf32, #tpu.memory_space<vmem>>) attributes {dimension_semantics = [#tpu.dimension_semantics<arbitrary>], iteration_bounds = array<i64: 1>, scalar_prefetch = 0 : i64, scratch_operands = 0 : i64, tpu.core_type = #tpu.core_type<tc>, window_params = [{pipeline_mode = #tpu.pipeline_mode<synchronous>, transform_indices = @transform_0, window_bounds = array<i64: 16, 3>}, {pipeline_mode = #tpu.pipeline_mode<synchronous>, transform_indices = @transform_1, window_bounds = array<i64: 16, 3>}, {pipeline_mode = #tpu.pipeline_mode<synchronous>, transform_indices = @transform_2, window_bounds = array<i64: 16, 32>}, {pipeline_mode = #tpu.pipeline_mode<synchronous>, transform_indices = @transform_3, window_bounds = array<i64: 16, 32>}, {pipeline_mode = #tpu.pipeline_mode<synchronous>, transform_indices = @transform_4, window_bounds = array<i64: 32, 160>}, {pipeline_mode = #tpu.pipeline_mode<synchronous>, transform_indices = @transform_5, window_bounds = array<i64: 9, 96>}, {pipeline_mode = #tpu.pipeline_mode<synchronous>, transform_indices = @transform_6, window_bounds = array<i64: 96, 96>}, {pipeline_mode = #tpu.pipeline_mode<synchronous>, transform_indices = @transform_7, window_bounds = array<i64: 32, 32>}, {pipeline_mode = #tpu.pipeline_mode<synchronous>, transform_indices = @transform_8, window_bounds = array<i64: 64, 128>}, {pipeline_mode = #tpu.pipeline_mode<synchronous>, transform_indices = @transform_9, window_bounds = array<i64: 32, 32>}, {pipeline_mode = #tpu.pipeline_mode<synchronous>, transform_indices = @transform_10, window_bounds = array<i64: 32, 3>}, {pipeline_mode = #tpu.pipeline_mode<synchronous>, transform_indices = @transform_11, window_bounds = array<i64: 11, 128>}, {pipeline_mode = #tpu.pipeline_mode<synchronous>, transform_indices = @transform_12, window_bounds = array<i64: 4, 16, 3>}]} {
    %0 = tpu.iota {dimensions = array<i32: 0>} : vector<16x1xi32>
    %c0_i32 = arith.constant 0 : i32
    %1 = vector.broadcast %c0_i32 : i32 to vector<16x1xi32>
    %2 = arith.cmpi eq, %0, %1 : vector<16x1xi32>
    %c15_i32 = arith.constant 15 : i32
    %3 = vector.broadcast %c15_i32 : i32 to vector<16x1xi32>
    %4 = arith.cmpi eq, %0, %3 : vector<16x1xi32>
    %c0 = arith.constant 0 : index
    %c0_0 = arith.constant 0 : index
    %5 = vector.load %arg3[%c0, %c0_0] : memref<16x32xf32, #tpu.memory_space<vmem>>, vector<16x32xf32>
    %c0_1 = arith.constant 0 : index
    %c0_2 = arith.constant 0 : index
    %6 = vector.load %arg2[%c0_1, %c0_2] : memref<16x3xf32, #tpu.memory_space<vmem>>, vector<16x3xf32>
    %c0_i32_3 = arith.constant 0 : i32
    %c4_i32 = arith.constant 4 : i32
    %7 = arith.addi %c0_i32_3, %c4_i32 : i32
    %c1_i32 = arith.constant 1 : i32
    %8:2 = scf.for %arg14 = %c0_i32_3 to %7 step %c1_i32 iter_args(%arg15 = %5, %arg16 = %6) -> (vector<16x32xf32>, vector<16x3xf32>)  : i32 {
      %c0_5 = arith.constant 0 : index
      %c0_6 = arith.constant 0 : index
      %9 = vector.load %arg1[%c0_5, %c0_6] : memref<16x3xf32, #tpu.memory_space<vmem>>, vector<16x3xf32>
      %10 = vector.extract_strided_slice %arg16 {offsets = [0, 0], sizes = [16, 1], strides = [1, 1]} : vector<16x3xf32> to vector<16x1xf32>
      %11 = vector.extract_strided_slice %arg16 {offsets = [0, 1], sizes = [16, 1], strides = [1, 1]} : vector<16x3xf32> to vector<16x1xf32>
      %12 = vector.extract_strided_slice %arg16 {offsets = [0, 2], sizes = [16, 1], strides = [1, 1]} : vector<16x3xf32> to vector<16x1xf32>
      %13 = vector.extract_strided_slice %9 {offsets = [0, 0], sizes = [16, 1], strides = [1, 1]} : vector<16x3xf32> to vector<16x1xf32>
      %14 = vector.extract_strided_slice %9 {offsets = [0, 1], sizes = [16, 1], strides = [1, 1]} : vector<16x3xf32> to vector<16x1xf32>
      %15 = vector.extract_strided_slice %9 {offsets = [0, 2], sizes = [16, 1], strides = [1, 1]} : vector<16x3xf32> to vector<16x1xf32>
      %cst = arith.constant -1.000000e+00 : f32
      %16 = vector.broadcast %cst : f32 to vector<16x1xf32>
      %17 = arith.mulf %16, %12 : vector<16x1xf32>
      %cst_7 = arith.constant 2.800000e+01 : f32
      %18 = vector.broadcast %cst_7 : f32 to vector<16x1xf32>
      %19 = arith.addf %17, %18 : vector<16x1xf32>
      %cst_8 = arith.constant 1.000000e+00 : f32
      %20 = vector.broadcast %cst_8 : f32 to vector<16x1xf32>
      %21 = arith.mulf %20, %11 : vector<16x1xf32>
      %cst_9 = arith.constant 2.000000e-02 : f32
      %22 = vector.broadcast %cst_9 : f32 to vector<16x1xf32>
      %23 = arith.mulf %22, %19 : vector<16x1xf32>
      %cst_10 = arith.constant 2.000000e-02 : f32
      %24 = vector.broadcast %cst_10 : f32 to vector<16x1xf32>
      %25 = arith.mulf %24, %21 : vector<16x1xf32>
      %cst_11 = arith.constant 1.000000e+00 : f32
      %26 = vector.broadcast %cst_11 : f32 to vector<16x1xf32>
      %27 = arith.mulf %23, %26 : vector<16x1xf32>
      %cst_12 = arith.constant 1.000000e+00 : f32
      %28 = vector.broadcast %cst_12 : f32 to vector<16x1xf32>
      %29 = arith.mulf %25, %28 : vector<16x1xf32>
      %cst_13 = arith.constant 2.000000e-01 : f32
      %30 = vector.broadcast %cst_13 : f32 to vector<16x1xf32>
      %31 = arith.mulf %30, %27 : vector<16x1xf32>
      %cst_14 = arith.constant 2.000000e-01 : f32
      %32 = vector.broadcast %cst_14 : f32 to vector<16x1xf32>
      %33 = arith.mulf %32, %29 : vector<16x1xf32>
      %cst_15 = arith.constant 2.000000e-01 : f32
      %34 = vector.broadcast %cst_15 : f32 to vector<16x1xf32>
      %35 = arith.mulf %34, %31 : vector<16x1xf32>
      %cst_16 = arith.constant -1.920000e-01 : f32
      %36 = vector.broadcast %cst_16 : f32 to vector<16x1xf32>
      %37 = arith.addf %36, %35 : vector<16x1xf32>
      %cst_17 = arith.constant 0.959999978 : f32
      %38 = vector.broadcast %cst_17 : f32 to vector<16x1xf32>
      %39 = arith.mulf %23, %38 : vector<16x1xf32>
      %cst_18 = arith.constant -2.000000e-02 : f32
      %40 = vector.broadcast %cst_18 : f32 to vector<16x1xf32>
      %41 = arith.mulf %40, %31 : vector<16x1xf32>
      %42 = arith.addf %39, %41 : vector<16x1xf32>
      %cst_19 = arith.constant 4.000000e-02 : f32
      %43 = vector.broadcast %cst_19 : f32 to vector<16x1xf32>
      %44 = arith.mulf %23, %43 : vector<16x1xf32>
      %cst_20 = arith.constant -1.992000e-02 : f32
      %45 = vector.broadcast %cst_20 : f32 to vector<16x1xf32>
      %46 = arith.addf %44, %45 : vector<16x1xf32>
      %cst_21 = arith.constant 0.959999978 : f32
      %47 = vector.broadcast %cst_21 : f32 to vector<16x1xf32>
      %48 = arith.mulf %25, %47 : vector<16x1xf32>
      %cst_22 = arith.constant -0.0533333346 : f32
      %49 = vector.broadcast %cst_22 : f32 to vector<16x1xf32>
      %50 = arith.mulf %49, %33 : vector<16x1xf32>
      %51 = arith.addf %48, %50 : vector<16x1xf32>
      %cst_23 = arith.constant 4.000000e-02 : f32
      %52 = vector.broadcast %cst_23 : f32 to vector<16x1xf32>
      %53 = arith.mulf %25, %52 : vector<16x1xf32>
      %cst_24 = arith.constant 2.500000e-01 : f32
      %54 = vector.broadcast %cst_24 : f32 to vector<16x1xf32>
      %55 = arith.mulf %54, %37 : vector<16x1xf32>
      %cst_25 = arith.constant 1.000000e+00 : f32
      %56 = vector.broadcast %cst_25 : f32 to vector<16x1xf32>
      %57 = arith.addf %55, %56 : vector<16x1xf32>
      %cst_26 = arith.constant 2.500000e-01 : f32
      %58 = vector.broadcast %cst_26 : f32 to vector<16x1xf32>
      %59 = arith.mulf %58, %42 : vector<16x1xf32>
      %cst_27 = arith.constant 2.500000e-01 : f32
      %60 = vector.broadcast %cst_27 : f32 to vector<16x1xf32>
      %61 = arith.mulf %60, %46 : vector<16x1xf32>
      %cst_28 = arith.constant 1.000000e+00 : f32
      %62 = vector.broadcast %cst_28 : f32 to vector<16x1xf32>
      %63 = arith.addf %61, %62 : vector<16x1xf32>
      %cst_29 = arith.constant 2.500000e-01 : f32
      %64 = vector.broadcast %cst_29 : f32 to vector<16x1xf32>
      %65 = arith.mulf %64, %51 : vector<16x1xf32>
      %cst_30 = arith.constant 2.500000e-01 : f32
      %66 = vector.broadcast %cst_30 : f32 to vector<16x1xf32>
      %67 = arith.mulf %66, %53 : vector<16x1xf32>
      %cst_31 = arith.constant -2.000000e-01 : f32
      %68 = vector.broadcast %cst_31 : f32 to vector<16x1xf32>
      %69 = arith.mulf %68, %57 : vector<16x1xf32>
      %cst_32 = arith.constant 2.000000e-01 : f32
      %70 = vector.broadcast %cst_32 : f32 to vector<16x1xf32>
      %71 = arith.mulf %70, %59 : vector<16x1xf32>
      %72 = arith.addf %69, %71 : vector<16x1xf32>
      %cst_33 = arith.constant 2.000000e-01 : f32
      %73 = vector.broadcast %cst_33 : f32 to vector<16x1xf32>
      %74 = arith.mulf %73, %63 : vector<16x1xf32>
      %cst_34 = arith.constant -9.560000e-03 : f32
      %75 = vector.broadcast %cst_34 : f32 to vector<16x1xf32>
      %76 = arith.addf %75, %74 : vector<16x1xf32>
      %77 = arith.mulf %23, %57 : vector<16x1xf32>
      %cst_35 = arith.constant -2.000000e-02 : f32
      %78 = vector.broadcast %cst_35 : f32 to vector<16x1xf32>
      %79 = arith.mulf %78, %59 : vector<16x1xf32>
      %80 = arith.addf %77, %79 : vector<16x1xf32>
      %cst_36 = arith.constant 4.780000e-02 : f32
      %81 = vector.broadcast %cst_36 : f32 to vector<16x1xf32>
      %82 = arith.mulf %23, %81 : vector<16x1xf32>
      %cst_37 = arith.constant -2.000000e-02 : f32
      %83 = vector.broadcast %cst_37 : f32 to vector<16x1xf32>
      %84 = arith.mulf %83, %63 : vector<16x1xf32>
      %85 = arith.addf %82, %84 : vector<16x1xf32>
      %86 = arith.mulf %25, %57 : vector<16x1xf32>
      %cst_38 = arith.constant -0.0533333346 : f32
      %87 = vector.broadcast %cst_38 : f32 to vector<16x1xf32>
      %88 = arith.mulf %87, %65 : vector<16x1xf32>
      %89 = arith.addf %86, %88 : vector<16x1xf32>
      %cst_39 = arith.constant 4.780000e-02 : f32
      %90 = vector.broadcast %cst_39 : f32 to vector<16x1xf32>
      %91 = arith.mulf %25, %90 : vector<16x1xf32>
      %cst_40 = arith.constant -0.0533333346 : f32
      %92 = vector.broadcast %cst_40 : f32 to vector<16x1xf32>
      %93 = arith.mulf %92, %67 : vector<16x1xf32>
      %94 = arith.addf %91, %93 : vector<16x1xf32>
      %cst_41 = arith.constant 0.333333343 : f32
      %95 = vector.broadcast %cst_41 : f32 to vector<16x1xf32>
      %96 = arith.mulf %95, %72 : vector<16x1xf32>
      %cst_42 = arith.constant 1.000000e+00 : f32
      %97 = vector.broadcast %cst_42 : f32 to vector<16x1xf32>
      %98 = arith.addf %96, %97 : vector<16x1xf32>
      %cst_43 = arith.constant 0.333333343 : f32
      %99 = vector.broadcast %cst_43 : f32 to vector<16x1xf32>
      %100 = arith.mulf %99, %76 : vector<16x1xf32>
      %cst_44 = arith.constant 0.333333343 : f32
      %101 = vector.broadcast %cst_44 : f32 to vector<16x1xf32>
      %102 = arith.mulf %101, %80 : vector<16x1xf32>
      %cst_45 = arith.constant 0.333333343 : f32
      %103 = vector.broadcast %cst_45 : f32 to vector<16x1xf32>
      %104 = arith.mulf %103, %85 : vector<16x1xf32>
      %cst_46 = arith.constant 1.000000e+00 : f32
      %105 = vector.broadcast %cst_46 : f32 to vector<16x1xf32>
      %106 = arith.addf %104, %105 : vector<16x1xf32>
      %cst_47 = arith.constant 0.333333343 : f32
      %107 = vector.broadcast %cst_47 : f32 to vector<16x1xf32>
      %108 = arith.mulf %107, %89 : vector<16x1xf32>
      %cst_48 = arith.constant 0.333333343 : f32
      %109 = vector.broadcast %cst_48 : f32 to vector<16x1xf32>
      %110 = arith.mulf %109, %94 : vector<16x1xf32>
      %cst_49 = arith.constant -2.000000e-01 : f32
      %111 = vector.broadcast %cst_49 : f32 to vector<16x1xf32>
      %112 = arith.mulf %111, %98 : vector<16x1xf32>
      %cst_50 = arith.constant 2.000000e-01 : f32
      %113 = vector.broadcast %cst_50 : f32 to vector<16x1xf32>
      %114 = arith.mulf %113, %102 : vector<16x1xf32>
      %115 = arith.addf %112, %114 : vector<16x1xf32>
      %cst_51 = arith.constant -2.000000e-01 : f32
      %116 = vector.broadcast %cst_51 : f32 to vector<16x1xf32>
      %117 = arith.mulf %116, %100 : vector<16x1xf32>
      %cst_52 = arith.constant 2.000000e-01 : f32
      %118 = vector.broadcast %cst_52 : f32 to vector<16x1xf32>
      %119 = arith.mulf %118, %106 : vector<16x1xf32>
      %120 = arith.addf %117, %119 : vector<16x1xf32>
      %121 = arith.mulf %23, %98 : vector<16x1xf32>
      %cst_53 = arith.constant -2.000000e-02 : f32
      %122 = vector.broadcast %cst_53 : f32 to vector<16x1xf32>
      %123 = arith.mulf %122, %102 : vector<16x1xf32>
      %124 = arith.addf %121, %123 : vector<16x1xf32>
      %125 = arith.mulf %23, %100 : vector<16x1xf32>
      %cst_54 = arith.constant -2.000000e-02 : f32
      %126 = vector.broadcast %cst_54 : f32 to vector<16x1xf32>
      %127 = arith.mulf %126, %106 : vector<16x1xf32>
      %128 = arith.addf %125, %127 : vector<16x1xf32>
      %129 = arith.mulf %25, %98 : vector<16x1xf32>
      %cst_55 = arith.constant -0.0533333346 : f32
      %130 = vector.broadcast %cst_55 : f32 to vector<16x1xf32>
      %131 = arith.mulf %130, %108 : vector<16x1xf32>
      %132 = arith.addf %129, %131 : vector<16x1xf32>
      %133 = arith.mulf %25, %100 : vector<16x1xf32>
      %cst_56 = arith.constant -0.0533333346 : f32
      %134 = vector.broadcast %cst_56 : f32 to vector<16x1xf32>
      %135 = arith.mulf %134, %110 : vector<16x1xf32>
      %136 = arith.addf %133, %135 : vector<16x1xf32>
      %cst_57 = arith.constant 5.000000e-01 : f32
      %137 = vector.broadcast %cst_57 : f32 to vector<16x1xf32>
      %138 = arith.mulf %137, %115 : vector<16x1xf32>
      %cst_58 = arith.constant 1.000000e+00 : f32
      %139 = vector.broadcast %cst_58 : f32 to vector<16x1xf32>
      %140 = arith.addf %138, %139 : vector<16x1xf32>
      %cst_59 = arith.constant 5.000000e-01 : f32
      %141 = vector.broadcast %cst_59 : f32 to vector<16x1xf32>
      %142 = arith.mulf %141, %120 : vector<16x1xf32>
      %cst_60 = arith.constant 5.000000e-01 : f32
      %143 = vector.broadcast %cst_60 : f32 to vector<16x1xf32>
      %144 = arith.mulf %143, %124 : vector<16x1xf32>
      %cst_61 = arith.constant 5.000000e-01 : f32
      %145 = vector.broadcast %cst_61 : f32 to vector<16x1xf32>
      %146 = arith.mulf %145, %128 : vector<16x1xf32>
      %cst_62 = arith.constant 1.000000e+00 : f32
      %147 = vector.broadcast %cst_62 : f32 to vector<16x1xf32>
      %148 = arith.addf %146, %147 : vector<16x1xf32>
      %cst_63 = arith.constant 5.000000e-01 : f32
      %149 = vector.broadcast %cst_63 : f32 to vector<16x1xf32>
      %150 = arith.mulf %149, %132 : vector<16x1xf32>
      %cst_64 = arith.constant 5.000000e-01 : f32
      %151 = vector.broadcast %cst_64 : f32 to vector<16x1xf32>
      %152 = arith.mulf %151, %136 : vector<16x1xf32>
      %cst_65 = arith.constant -2.000000e-01 : f32
      %153 = vector.broadcast %cst_65 : f32 to vector<16x1xf32>
      %154 = arith.mulf %153, %140 : vector<16x1xf32>
      %cst_66 = arith.constant 2.000000e-01 : f32
      %155 = vector.broadcast %cst_66 : f32 to vector<16x1xf32>
      %156 = arith.mulf %155, %144 : vector<16x1xf32>
      %157 = arith.addf %154, %156 : vector<16x1xf32>
      %cst_67 = arith.constant -2.000000e-01 : f32
      %158 = vector.broadcast %cst_67 : f32 to vector<16x1xf32>
      %159 = arith.mulf %158, %142 : vector<16x1xf32>
      %cst_68 = arith.constant 2.000000e-01 : f32
      %160 = vector.broadcast %cst_68 : f32 to vector<16x1xf32>
      %161 = arith.mulf %160, %148 : vector<16x1xf32>
      %162 = arith.addf %159, %161 : vector<16x1xf32>
      %163 = arith.mulf %23, %140 : vector<16x1xf32>
      %cst_69 = arith.constant -2.000000e-02 : f32
      %164 = vector.broadcast %cst_69 : f32 to vector<16x1xf32>
      %165 = arith.mulf %164, %144 : vector<16x1xf32>
      %166 = arith.addf %163, %165 : vector<16x1xf32>
      %167 = arith.mulf %23, %142 : vector<16x1xf32>
      %cst_70 = arith.constant -2.000000e-02 : f32
      %168 = vector.broadcast %cst_70 : f32 to vector<16x1xf32>
      %169 = arith.mulf %168, %148 : vector<16x1xf32>
      %170 = arith.addf %167, %169 : vector<16x1xf32>
      %171 = arith.mulf %25, %140 : vector<16x1xf32>
      %cst_71 = arith.constant -0.0533333346 : f32
      %172 = vector.broadcast %cst_71 : f32 to vector<16x1xf32>
      %173 = arith.mulf %172, %150 : vector<16x1xf32>
      %174 = arith.addf %171, %173 : vector<16x1xf32>
      %175 = arith.mulf %25, %142 : vector<16x1xf32>
      %cst_72 = arith.constant -0.0533333346 : f32
      %176 = vector.broadcast %cst_72 : f32 to vector<16x1xf32>
      %177 = arith.mulf %176, %152 : vector<16x1xf32>
      %178 = arith.addf %175, %177 : vector<16x1xf32>
      %cst_73 = arith.constant 1.000000e+00 : f32
      %179 = vector.broadcast %cst_73 : f32 to vector<16x1xf32>
      %180 = arith.mulf %179, %157 : vector<16x1xf32>
      %cst_74 = arith.constant 1.000000e+00 : f32
      %181 = vector.broadcast %cst_74 : f32 to vector<16x1xf32>
      %182 = arith.addf %180, %181 : vector<16x1xf32>
      %cst_75 = arith.constant 1.000000e+00 : f32
      %183 = vector.broadcast %cst_75 : f32 to vector<16x1xf32>
      %184 = arith.mulf %183, %162 : vector<16x1xf32>
      %cst_76 = arith.constant 1.000000e+00 : f32
      %185 = vector.broadcast %cst_76 : f32 to vector<16x1xf32>
      %186 = arith.mulf %185, %166 : vector<16x1xf32>
      %cst_77 = arith.constant 1.000000e+00 : f32
      %187 = vector.broadcast %cst_77 : f32 to vector<16x1xf32>
      %188 = arith.mulf %187, %170 : vector<16x1xf32>
      %cst_78 = arith.constant 1.000000e+00 : f32
      %189 = vector.broadcast %cst_78 : f32 to vector<16x1xf32>
      %190 = arith.addf %188, %189 : vector<16x1xf32>
      %cst_79 = arith.constant 1.000000e+00 : f32
      %191 = vector.broadcast %cst_79 : f32 to vector<16x1xf32>
      %192 = arith.mulf %191, %174 : vector<16x1xf32>
      %cst_80 = arith.constant 1.000000e+00 : f32
      %193 = vector.broadcast %cst_80 : f32 to vector<16x1xf32>
      %194 = arith.mulf %193, %178 : vector<16x1xf32>
      %195 = vector.extract_strided_slice %arg16 {offsets = [1, 0], sizes = [15, 3], strides = [1, 1]} : vector<16x3xf32> to vector<15x3xf32>
      %196 = vector.extract_strided_slice %arg16 {offsets = [15, 0], sizes = [1, 3], strides = [1, 1]} : vector<16x3xf32> to vector<1x3xf32>
      %197 = tpu.concatenate %195, %196 in 0 : vector<15x3xf32>, vector<1x3xf32> -> vector<16x3xf32>
      %198 = vector.extract_strided_slice %197 {offsets = [0, 0], sizes = [16, 1], strides = [1, 1]} : vector<16x3xf32> to vector<16x1xf32>
      %199 = vector.extract_strided_slice %197 {offsets = [0, 1], sizes = [16, 1], strides = [1, 1]} : vector<16x3xf32> to vector<16x1xf32>
      %200 = vector.extract_strided_slice %197 {offsets = [0, 2], sizes = [16, 1], strides = [1, 1]} : vector<16x3xf32> to vector<16x1xf32>
      %201 = arith.mulf %182, %10 : vector<16x1xf32>
      %202 = arith.mulf %184, %11 : vector<16x1xf32>
      %203 = arith.addf %201, %202 : vector<16x1xf32>
      %204 = arith.mulf %186, %10 : vector<16x1xf32>
      %205 = arith.mulf %190, %11 : vector<16x1xf32>
      %206 = arith.addf %204, %205 : vector<16x1xf32>
      %207 = arith.mulf %192, %10 : vector<16x1xf32>
      %208 = arith.mulf %194, %11 : vector<16x1xf32>
      %209 = arith.addf %207, %208 : vector<16x1xf32>
      %cst_81 = arith.constant 0.94806391 : f32
      %210 = vector.broadcast %cst_81 : f32 to vector<16x1xf32>
      %211 = arith.mulf %210, %12 : vector<16x1xf32>
      %212 = arith.addf %209, %211 : vector<16x1xf32>
      %213 = arith.subf %198, %203 : vector<16x1xf32>
      %214 = arith.subf %199, %206 : vector<16x1xf32>
      %215 = arith.subf %200, %212 : vector<16x1xf32>
      %cst_82 = arith.constant 1.000000e+00 : f32
      %216 = vector.broadcast %cst_82 : f32 to vector<16x1xf32>
      %217 = arith.mulf %216, %213 : vector<16x1xf32>
      %cst_83 = arith.constant 1.000000e+00 : f32
      %218 = vector.broadcast %cst_83 : f32 to vector<16x1xf32>
      %219 = arith.mulf %218, %214 : vector<16x1xf32>
      %cst_84 = arith.constant 1.000000e+00 : f32
      %220 = vector.broadcast %cst_84 : f32 to vector<16x1xf32>
      %221 = arith.mulf %220, %215 : vector<16x1xf32>
      %222 = tpu.concatenate %217, %219, %221 in 1 : vector<16x1xf32>, vector<16x1xf32>, vector<16x1xf32> -> vector<16x3xf32>
      %223 = vector.extract_strided_slice %222 {offsets = [0, 0], sizes = [1, 3], strides = [1, 1]} : vector<16x3xf32> to vector<1x3xf32>
      %224 = vector.extract_strided_slice %222 {offsets = [0, 0], sizes = [15, 3], strides = [1, 1]} : vector<16x3xf32> to vector<15x3xf32>
      %225 = tpu.concatenate %223, %224 in 0 : vector<1x3xf32>, vector<15x3xf32> -> vector<16x3xf32>
      %cst_85 = arith.constant 0.000000e+00 : f32
      %226 = vector.broadcast %cst_85 : f32 to vector<16x3xf32>
      %227 = arith.subf %226, %225 : vector<16x3xf32>
      %cst_86 = arith.constant 0.000000e+00 : f32
      %228 = vector.shape_cast %2 : vector<16x1xi1> to vector<16x1xi1>
      %229 = vector.broadcast %228 : vector<16x1xi1> to vector<16x3xi1>
      %230 = vector.broadcast %cst_86 : f32 to vector<16x3xf32>
      %231 = arith.select %229, %230, %227 : vector<16x3xi1>, vector<16x3xf32>
      %232 = arith.mulf %182, %217 : vector<16x1xf32>
      %233 = arith.mulf %186, %219 : vector<16x1xf32>
      %234 = arith.addf %232, %233 : vector<16x1xf32>
      %235 = arith.mulf %192, %221 : vector<16x1xf32>
      %236 = arith.addf %234, %235 : vector<16x1xf32>
      %237 = arith.mulf %184, %217 : vector<16x1xf32>
      %238 = arith.mulf %190, %219 : vector<16x1xf32>
      %239 = arith.addf %237, %238 : vector<16x1xf32>
      %240 = arith.mulf %194, %221 : vector<16x1xf32>
      %241 = arith.addf %239, %240 : vector<16x1xf32>
      %cst_87 = arith.constant 0.94806391 : f32
      %242 = vector.broadcast %cst_87 : f32 to vector<16x1xf32>
      %243 = arith.mulf %242, %221 : vector<16x1xf32>
      %244 = tpu.concatenate %236, %241, %243 in 1 : vector<16x1xf32>, vector<16x1xf32>, vector<16x1xf32> -> vector<16x3xf32>
      %cst_88 = arith.constant 0.000000e+00 : f32
      %245 = vector.shape_cast %4 : vector<16x1xi1> to vector<16x1xi1>
      %246 = vector.broadcast %245 : vector<16x1xi1> to vector<16x3xi1>
      %247 = vector.broadcast %cst_88 : f32 to vector<16x3xf32>
      %248 = arith.select %246, %247, %244 : vector<16x3xi1>, vector<16x3xf32>
      %cst_89 = arith.constant 1.000000e+00 : f32
      %249 = vector.broadcast %cst_89 : f32 to vector<16x1xf32>
      %250 = arith.mulf %249, %10 : vector<16x1xf32>
      %cst_90 = arith.constant 1.000000e+00 : f32
      %251 = vector.broadcast %cst_90 : f32 to vector<16x1xf32>
      %252 = arith.mulf %251, %11 : vector<16x1xf32>
      %cst_91 = arith.constant 1.000000e+00 : f32
      %253 = vector.broadcast %cst_91 : f32 to vector<16x1xf32>
      %254 = arith.mulf %253, %12 : vector<16x1xf32>
      %255 = arith.subf %13, %250 : vector<16x1xf32>
      %256 = arith.subf %14, %252 : vector<16x1xf32>
      %257 = arith.subf %15, %254 : vector<16x1xf32>
      %cst_92 = arith.constant 1.000000e+00 : f32
      %258 = vector.broadcast %cst_92 : f32 to vector<16x1xf32>
      %259 = arith.mulf %258, %255 : vector<16x1xf32>
      %cst_93 = arith.constant 1.000000e+00 : f32
      %260 = vector.broadcast %cst_93 : f32 to vector<16x1xf32>
      %261 = arith.mulf %260, %256 : vector<16x1xf32>
      %cst_94 = arith.constant 1.000000e+00 : f32
      %262 = vector.broadcast %cst_94 : f32 to vector<16x1xf32>
      %263 = arith.mulf %262, %257 : vector<16x1xf32>
      %264 = tpu.concatenate %259, %261, %263 in 1 : vector<16x1xf32>, vector<16x1xf32>, vector<16x1xf32> -> vector<16x3xf32>
      %265 = arith.addf %231, %264 : vector<16x3xf32>
      %266 = arith.addf %265, %248 : vector<16x3xf32>
      %c0_95 = arith.constant 0 : index
      %c0_96 = arith.constant 0 : index
      %267 = vector.load %arg5[%c0_95, %c0_96] : memref<32x160xf32, #tpu.memory_space<vmem>>, vector<32x160xf32>
      %cst_97 = arith.constant dense<0.000000e+00> : vector<16x160xf32>
      %268 = tpu.matmul %arg15, %267, %cst_97 {dimension_numbers = #tpu.dot_dimension_numbers<[1], [0], [0], [1], [0, 0, 1, 1], [], []>} : vector<16x32xf32>, vector<32x160xf32>, vector<16x160xf32> -> vector<16x160xf32>
      %269 = tpu.concatenate %231, %264, %248 in 1 : vector<16x3xf32>, vector<16x3xf32>, vector<16x3xf32> -> vector<16x9xf32>
      %c0_98 = arith.constant 0 : index
      %c0_99 = arith.constant 0 : index
      %270 = vector.load %arg6[%c0_98, %c0_99] : memref<9x96xf32, #tpu.memory_space<vmem>>, vector<9x96xf32>
      %cst_100 = arith.constant dense<0.000000e+00> : vector<16x96xf32>
      %271 = tpu.matmul %269, %270, %cst_100 {dimension_numbers = #tpu.dot_dimension_numbers<[1], [0], [0], [1], [0, 0, 1, 1], [], []>} : vector<16x9xf32>, vector<9x96xf32>, vector<16x96xf32> -> vector<16x96xf32>
      %272 = vector.extract_strided_slice %268 {offsets = [0, 0], sizes = [16, 32], strides = [1, 1]} : vector<16x160xf32> to vector<16x32xf32>
      %273 = vector.extract_strided_slice %268 {offsets = [0, 32], sizes = [16, 32], strides = [1, 1]} : vector<16x160xf32> to vector<16x32xf32>
      %274 = vector.extract_strided_slice %273 {offsets = [0, 0], sizes = [1, 32], strides = [1, 1]} : vector<16x32xf32> to vector<1x32xf32>
      %275 = vector.extract_strided_slice %273 {offsets = [0, 0], sizes = [15, 32], strides = [1, 1]} : vector<16x32xf32> to vector<15x32xf32>
      %276 = tpu.concatenate %274, %275 in 0 : vector<1x32xf32>, vector<15x32xf32> -> vector<16x32xf32>
      %277 = arith.addf %272, %276 : vector<16x32xf32>
      %278 = vector.extract_strided_slice %271 {offsets = [0, 0], sizes = [16, 32], strides = [1, 1]} : vector<16x96xf32> to vector<16x32xf32>
      %279 = arith.addf %277, %278 : vector<16x32xf32>
      %c0_101 = arith.constant 0 : index
      %c0_102 = arith.constant 0 : index
      %280 = vector.load %arg12[%c0_101, %c0_102] : memref<11x128xf32, #tpu.memory_space<vmem>>, vector<1x32xf32>
      %281 = vector.broadcast %280 : vector<1x32xf32> to vector<16x32xf32>
      %282 = arith.addf %279, %281 : vector<16x32xf32>
      %283 = vector.extract_strided_slice %268 {offsets = [0, 64], sizes = [16, 32], strides = [1, 1]} : vector<16x160xf32> to vector<16x32xf32>
      %c0_103 = arith.constant 0 : index
      %c0_104 = arith.constant 0 : index
      %284 = vector.load %arg4[%c0_103, %c0_104] : memref<16x32xf32, #tpu.memory_space<vmem>>, vector<16x32xf32>
      %285 = arith.addf %283, %284 : vector<16x32xf32>
      %286 = vector.extract_strided_slice %271 {offsets = [0, 32], sizes = [16, 32], strides = [1, 1]} : vector<16x96xf32> to vector<16x32xf32>
      %287 = arith.addf %285, %286 : vector<16x32xf32>
      %288 = vector.extract_strided_slice %268 {offsets = [0, 96], sizes = [16, 32], strides = [1, 1]} : vector<16x160xf32> to vector<16x32xf32>
      %289 = vector.extract_strided_slice %268 {offsets = [0, 128], sizes = [16, 32], strides = [1, 1]} : vector<16x160xf32> to vector<16x32xf32>
      %290 = vector.extract_strided_slice %289 {offsets = [1, 0], sizes = [15, 32], strides = [1, 1]} : vector<16x32xf32> to vector<15x32xf32>
      %291 = vector.extract_strided_slice %289 {offsets = [15, 0], sizes = [1, 32], strides = [1, 1]} : vector<16x32xf32> to vector<1x32xf32>
      %292 = tpu.concatenate %290, %291 in 0 : vector<15x32xf32>, vector<1x32xf32> -> vector<16x32xf32>
      %293 = arith.addf %288, %292 : vector<16x32xf32>
      %294 = vector.extract_strided_slice %271 {offsets = [0, 64], sizes = [16, 32], strides = [1, 1]} : vector<16x96xf32> to vector<16x32xf32>
      %295 = arith.addf %293, %294 : vector<16x32xf32>
      %c1 = arith.constant 1 : index
      %c0_105 = arith.constant 0 : index
      %296 = vector.load %arg12[%c1, %c0_105] : memref<11x128xf32, #tpu.memory_space<vmem>>, vector<1x32xf32>
      %297 = vector.broadcast %296 : vector<1x32xf32> to vector<16x32xf32>
      %298 = arith.addf %295, %297 : vector<16x32xf32>
      %299 = tpu.concatenate %282, %287, %298 in 1 : vector<16x32xf32>, vector<16x32xf32>, vector<16x32xf32> -> vector<16x96xf32>
      %cst_106 = arith.constant 0.000000e+00 : f32
      %300 = vector.broadcast %cst_106 : f32 to vector<16x96xf32>
      %301 = arith.cmpf ogt, %299, %300 : vector<16x96xf32>
      %cst_107 = arith.constant 0.00999999977 : f32
      %302 = vector.broadcast %cst_107 : f32 to vector<16x96xf32>
      %303 = arith.mulf %302, %299 : vector<16x96xf32>
      %304 = arith.select %301, %299, %303 : vector<16x96xi1>, vector<16x96xf32>
      %c0_108 = arith.constant 0 : index
      %c0_109 = arith.constant 0 : index
      %305 = vector.load %arg7[%c0_108, %c0_109] : memref<96x96xf32, #tpu.memory_space<vmem>>, vector<96x96xf32>
      %cst_110 = arith.constant dense<0.000000e+00> : vector<16x96xf32>
      %306 = tpu.matmul %304, %305, %cst_110 {dimension_numbers = #tpu.dot_dimension_numbers<[1], [0], [0], [1], [0, 0, 1, 1], [], []>} : vector<16x96xf32>, vector<96x96xf32>, vector<16x96xf32> -> vector<16x96xf32>
      %c2 = arith.constant 2 : index
      %c0_111 = arith.constant 0 : index
      %307 = vector.load %arg12[%c2, %c0_111] : memref<11x128xf32, #tpu.memory_space<vmem>>, vector<1x96xf32>
      %308 = vector.broadcast %307 : vector<1x96xf32> to vector<16x96xf32>
      %309 = arith.addf %306, %308 : vector<16x96xf32>
      %cst_112 = arith.constant 0.000000e+00 : f32
      %310 = vector.broadcast %cst_112 : f32 to vector<16x96xf32>
      %311 = arith.cmpf ogt, %309, %310 : vector<16x96xf32>
      %cst_113 = arith.constant 0.00999999977 : f32
      %312 = vector.broadcast %cst_113 : f32 to vector<16x96xf32>
      %313 = arith.mulf %312, %309 : vector<16x96xf32>
      %314 = arith.select %311, %309, %313 : vector<16x96xi1>, vector<16x96xf32>
      %315 = vector.extract_strided_slice %314 {offsets = [0, 32], sizes = [16, 32], strides = [1, 1]} : vector<16x96xf32> to vector<16x32xf32>
      %316 = vector.extract_strided_slice %314 {offsets = [0, 0], sizes = [16, 32], strides = [1, 1]} : vector<16x96xf32> to vector<16x32xf32>
      %cst_114 = arith.constant 0.000000e+00 : f32
      %317 = vector.shape_cast %2 : vector<16x1xi1> to vector<16x1xi1>
      %318 = vector.broadcast %317 : vector<16x1xi1> to vector<16x32xi1>
      %319 = vector.broadcast %cst_114 : f32 to vector<16x32xf32>
      %320 = arith.select %318, %319, %316 : vector<16x32xi1>, vector<16x32xf32>
      %321 = arith.addf %315, %320 : vector<16x32xf32>
      %322 = vector.extract_strided_slice %314 {offsets = [0, 64], sizes = [16, 32], strides = [1, 1]} : vector<16x96xf32> to vector<16x32xf32>
      %cst_115 = arith.constant 0.000000e+00 : f32
      %323 = vector.shape_cast %4 : vector<16x1xi1> to vector<16x1xi1>
      %324 = vector.broadcast %323 : vector<16x1xi1> to vector<16x32xi1>
      %325 = vector.broadcast %cst_115 : f32 to vector<16x32xf32>
      %326 = arith.select %324, %325, %322 : vector<16x32xi1>, vector<16x32xf32>
      %327 = arith.addf %321, %326 : vector<16x32xf32>
      %c0_116 = arith.constant 0 : index
      %c0_117 = arith.constant 0 : index
      %328 = vector.load %arg8[%c0_116, %c0_117] : memref<32x32xf32, #tpu.memory_space<vmem>>, vector<32x32xf32>
      %cst_118 = arith.constant dense<0.000000e+00> : vector<16x32xf32>
      %329 = tpu.matmul %327, %328, %cst_118 {dimension_numbers = #tpu.dot_dimension_numbers<[1], [0], [0], [1], [0, 0, 1, 1], [], []>} : vector<16x32xf32>, vector<32x32xf32>, vector<16x32xf32> -> vector<16x32xf32>
      %c3 = arith.constant 3 : index
      %c0_119 = arith.constant 0 : index
      %330 = vector.load %arg12[%c3, %c0_119] : memref<11x128xf32, #tpu.memory_space<vmem>>, vector<1x32xf32>
      %331 = vector.broadcast %330 : vector<1x32xf32> to vector<16x32xf32>
      %332 = arith.addf %329, %331 : vector<16x32xf32>
      %cst_120 = arith.constant dense<0.000000e+00> : vector<32xf32>
      %333 = vector.multi_reduction <add>, %332, %cst_120 [0] : vector<16x32xf32> to vector<32xf32>
      %334 = vector.shape_cast %333 : vector<32xf32> to vector<1x32xf32>
      %cst_121 = arith.constant 1.600000e+01 : f32
      %335 = vector.broadcast %cst_121 : f32 to vector<1x32xf32>
      %336 = arith.divf %334, %335 : vector<1x32xf32>
      %337 = vector.broadcast %336 : vector<1x32xf32> to vector<16x32xf32>
      %338 = arith.subf %332, %337 : vector<16x32xf32>
      %339 = arith.mulf %338, %338 : vector<16x32xf32>
      %cst_122 = arith.constant dense<0.000000e+00> : vector<32xf32>
      %340 = vector.multi_reduction <add>, %339, %cst_122 [0] : vector<16x32xf32> to vector<32xf32>
      %341 = vector.shape_cast %340 : vector<32xf32> to vector<1x32xf32>
      %cst_123 = arith.constant 1.600000e+01 : f32
      %342 = vector.broadcast %cst_123 : f32 to vector<1x32xf32>
      %343 = arith.divf %341, %342 : vector<1x32xf32>
      %344 = vector.broadcast %336 : vector<1x32xf32> to vector<16x32xf32>
      %345 = arith.subf %332, %344 : vector<16x32xf32>
      %cst_124 = arith.constant 9.99999974E-6 : f32
      %346 = vector.broadcast %cst_124 : f32 to vector<1x32xf32>
      %347 = arith.addf %343, %346 : vector<1x32xf32>
      %348 = math.rsqrt %347 : vector<1x32xf32>
      %349 = vector.broadcast %348 : vector<1x32xf32> to vector<16x32xf32>
      %350 = arith.mulf %345, %349 : vector<16x32xf32>
      %c4 = arith.constant 4 : index
      %c0_125 = arith.constant 0 : index
      %351 = vector.load %arg12[%c4, %c0_125] : memref<11x128xf32, #tpu.memory_space<vmem>>, vector<1x32xf32>
      %352 = vector.broadcast %351 : vector<1x32xf32> to vector<16x32xf32>
      %353 = arith.mulf %350, %352 : vector<16x32xf32>
      %c5 = arith.constant 5 : index
      %c0_126 = arith.constant 0 : index
      %354 = vector.load %arg12[%c5, %c0_126] : memref<11x128xf32, #tpu.memory_space<vmem>>, vector<1x32xf32>
      %355 = vector.broadcast %354 : vector<1x32xf32> to vector<16x32xf32>
      %356 = arith.addf %353, %355 : vector<16x32xf32>
      %cst_127 = arith.constant 0.000000e+00 : f32
      %357 = vector.broadcast %cst_127 : f32 to vector<16x32xf32>
      %358 = arith.cmpf ogt, %356, %357 : vector<16x32xf32>
      %cst_128 = arith.constant 0.00999999977 : f32
      %359 = vector.broadcast %cst_128 : f32 to vector<16x32xf32>
      %360 = arith.mulf %359, %356 : vector<16x32xf32>
      %361 = arith.select %358, %356, %360 : vector<16x32xi1>, vector<16x32xf32>
      %362 = tpu.concatenate %361, %arg15 in 1 : vector<16x32xf32>, vector<16x32xf32> -> vector<16x64xf32>
      %c0_129 = arith.constant 0 : index
      %c0_130 = arith.constant 0 : index
      %363 = vector.load %arg9[%c0_129, %c0_130] : memref<64x128xf32, #tpu.memory_space<vmem>>, vector<64x128xf32>
      %cst_131 = arith.constant dense<0.000000e+00> : vector<16x128xf32>
      %364 = tpu.matmul %362, %363, %cst_131 {dimension_numbers = #tpu.dot_dimension_numbers<[1], [0], [0], [1], [0, 0, 1, 1], [], []>} : vector<16x64xf32>, vector<64x128xf32>, vector<16x128xf32> -> vector<16x128xf32>
      %c6 = arith.constant 6 : index
      %c0_132 = arith.constant 0 : index
      %365 = vector.load %arg12[%c6, %c0_132] : memref<11x128xf32, #tpu.memory_space<vmem>>, vector<1x128xf32>
      %366 = vector.broadcast %365 : vector<1x128xf32> to vector<16x128xf32>
      %367 = arith.addf %364, %366 : vector<16x128xf32>
      %368 = vector.extract_strided_slice %367 {offsets = [0, 0], sizes = [16, 32], strides = [1, 1]} : vector<16x128xf32> to vector<16x32xf32>
      %369 = arith.negf %368 : vector<16x32xf32>
      %370 = math.exp %369 : vector<16x32xf32>
      %cst_133 = arith.constant 1.000000e+00 : f32
      %371 = vector.broadcast %cst_133 : f32 to vector<16x32xf32>
      %372 = arith.addf %371, %370 : vector<16x32xf32>
      %373 = arith.divf %371, %372 : vector<16x32xf32>
      %374 = vector.extract_strided_slice %367 {offsets = [0, 32], sizes = [16, 32], strides = [1, 1]} : vector<16x128xf32> to vector<16x32xf32>
      %375 = arith.negf %374 : vector<16x32xf32>
      %376 = math.exp %375 : vector<16x32xf32>
      %cst_134 = arith.constant 1.000000e+00 : f32
      %377 = vector.broadcast %cst_134 : f32 to vector<16x32xf32>
      %378 = arith.addf %377, %376 : vector<16x32xf32>
      %379 = arith.divf %377, %378 : vector<16x32xf32>
      %380 = vector.extract_strided_slice %367 {offsets = [0, 64], sizes = [16, 32], strides = [1, 1]} : vector<16x128xf32> to vector<16x32xf32>
      %381 = vector.extract_strided_slice %367 {offsets = [0, 96], sizes = [16, 32], strides = [1, 1]} : vector<16x128xf32> to vector<16x32xf32>
      %382 = arith.mulf %373, %381 : vector<16x32xf32>
      %383 = arith.addf %380, %382 : vector<16x32xf32>
      %384 = math.tanh %383 : vector<16x32xf32>
      %cst_135 = arith.constant 1.000000e+00 : f32
      %385 = vector.broadcast %cst_135 : f32 to vector<16x32xf32>
      %386 = arith.subf %385, %379 : vector<16x32xf32>
      %387 = arith.mulf %386, %384 : vector<16x32xf32>
      %388 = arith.mulf %379, %arg15 : vector<16x32xf32>
      %389 = arith.addf %387, %388 : vector<16x32xf32>
      %c0_136 = arith.constant 0 : index
      %c0_137 = arith.constant 0 : index
      %390 = vector.load %arg10[%c0_136, %c0_137] : memref<32x32xf32, #tpu.memory_space<vmem>>, vector<32x32xf32>
      %cst_138 = arith.constant dense<0.000000e+00> : vector<16x32xf32>
      %391 = tpu.matmul %389, %390, %cst_138 {dimension_numbers = #tpu.dot_dimension_numbers<[1], [0], [0], [1], [0, 0, 1, 1], [], []>} : vector<16x32xf32>, vector<32x32xf32>, vector<16x32xf32> -> vector<16x32xf32>
      %c7 = arith.constant 7 : index
      %c0_139 = arith.constant 0 : index
      %392 = vector.load %arg12[%c7, %c0_139] : memref<11x128xf32, #tpu.memory_space<vmem>>, vector<1x32xf32>
      %393 = vector.broadcast %392 : vector<1x32xf32> to vector<16x32xf32>
      %394 = arith.addf %391, %393 : vector<16x32xf32>
      %cst_140 = arith.constant dense<0.000000e+00> : vector<32xf32>
      %395 = vector.multi_reduction <add>, %394, %cst_140 [0] : vector<16x32xf32> to vector<32xf32>
      %396 = vector.shape_cast %395 : vector<32xf32> to vector<1x32xf32>
      %cst_141 = arith.constant 1.600000e+01 : f32
      %397 = vector.broadcast %cst_141 : f32 to vector<1x32xf32>
      %398 = arith.divf %396, %397 : vector<1x32xf32>
      %399 = vector.broadcast %398 : vector<1x32xf32> to vector<16x32xf32>
      %400 = arith.subf %394, %399 : vector<16x32xf32>
      %401 = arith.mulf %400, %400 : vector<16x32xf32>
      %cst_142 = arith.constant dense<0.000000e+00> : vector<32xf32>
      %402 = vector.multi_reduction <add>, %401, %cst_142 [0] : vector<16x32xf32> to vector<32xf32>
      %403 = vector.shape_cast %402 : vector<32xf32> to vector<1x32xf32>
      %cst_143 = arith.constant 1.600000e+01 : f32
      %404 = vector.broadcast %cst_143 : f32 to vector<1x32xf32>
      %405 = arith.divf %403, %404 : vector<1x32xf32>
      %406 = vector.broadcast %398 : vector<1x32xf32> to vector<16x32xf32>
      %407 = arith.subf %394, %406 : vector<16x32xf32>
      %cst_144 = arith.constant 9.99999974E-6 : f32
      %408 = vector.broadcast %cst_144 : f32 to vector<1x32xf32>
      %409 = arith.addf %405, %408 : vector<1x32xf32>
      %410 = math.rsqrt %409 : vector<1x32xf32>
      %411 = vector.broadcast %410 : vector<1x32xf32> to vector<16x32xf32>
      %412 = arith.mulf %407, %411 : vector<16x32xf32>
      %c8 = arith.constant 8 : index
      %c0_145 = arith.constant 0 : index
      %413 = vector.load %arg12[%c8, %c0_145] : memref<11x128xf32, #tpu.memory_space<vmem>>, vector<1x32xf32>
      %414 = vector.broadcast %413 : vector<1x32xf32> to vector<16x32xf32>
      %415 = arith.mulf %412, %414 : vector<16x32xf32>
      %c9 = arith.constant 9 : index
      %c0_146 = arith.constant 0 : index
      %416 = vector.load %arg12[%c9, %c0_146] : memref<11x128xf32, #tpu.memory_space<vmem>>, vector<1x32xf32>
      %417 = vector.broadcast %416 : vector<1x32xf32> to vector<16x32xf32>
      %418 = arith.addf %415, %417 : vector<16x32xf32>
      %cst_147 = arith.constant 0.000000e+00 : f32
      %419 = vector.broadcast %cst_147 : f32 to vector<16x32xf32>
      %420 = arith.maximumf %418, %419 : vector<16x32xf32>
      %c0_148 = arith.constant 0 : index
      %c0_149 = arith.constant 0 : index
      %421 = vector.load %arg11[%c0_148, %c0_149] : memref<32x3xf32, #tpu.memory_space<vmem>>, vector<32x3xf32>
      %cst_150 = arith.constant dense<0.000000e+00> : vector<16x3xf32>
      %422 = tpu.matmul %420, %421, %cst_150 {dimension_numbers = #tpu.dot_dimension_numbers<[1], [0], [0], [1], [0, 0, 1, 1], [], []>} : vector<16x32xf32>, vector<32x3xf32>, vector<16x3xf32> -> vector<16x3xf32>
      %c10 = arith.constant 10 : index
      %c0_151 = arith.constant 0 : index
      %423 = vector.load %arg12[%c10, %c0_151] : memref<11x128xf32, #tpu.memory_space<vmem>>, vector<1x3xf32>
      %424 = vector.broadcast %423 : vector<1x3xf32> to vector<16x3xf32>
      %425 = arith.addf %422, %424 : vector<16x3xf32>
      %cst_152 = arith.constant 1.000000e+00 : f32
      %426 = vector.broadcast %cst_152 : f32 to vector<16x3xf32>
      %427 = arith.mulf %426, %266 : vector<16x3xf32>
      %428 = arith.addf %425, %427 : vector<16x3xf32>
      %cst_153 = arith.constant 5.000000e-02 : f32
      %429 = vector.broadcast %cst_153 : f32 to vector<16x3xf32>
      %430 = arith.mulf %429, %428 : vector<16x3xf32>
      %431 = arith.addf %arg16, %430 : vector<16x3xf32>
      %432 = arith.index_cast %arg14 : i32 to index
      %c0_154 = arith.constant 0 : index
      %c0_155 = arith.constant 0 : index
      %433 = vector.load %arg13[%432, %c0_154, %c0_155] : memref<4x16x3xf32, #tpu.memory_space<vmem>>, vector<1x16x3xf32>
      %434 = vector.shape_cast %433 : vector<1x16x3xf32> to vector<16x3xf32>
      %435 = vector.shape_cast %431 : vector<16x3xf32> to vector<1x16x3xf32>
      tpu.vector_store %arg13[%432, %c0_154, %c0_155], %435 {strides = array<i32>} : memref<4x16x3xf32, #tpu.memory_space<vmem>>, vector<1x16x3xf32>,
      scf.yield %389, %431 : vector<16x32xf32>, vector<16x3xf32>
    }
    %c4_i32_4 = arith.constant 4 : i32
    return
  }
  func.func @transform_0(%arg0: i32) -> (i32, i32) {
    %c0_i32 = arith.constant 0 : i32
    %c0_i32_0 = arith.constant 0 : i32
    %c0_i32_1 = arith.constant 0 : i32
    return %c0_i32, %c0_i32_0 : i32, i32
  }
  func.func @transform_1(%arg0: i32) -> (i32, i32) {
    %c0_i32 = arith.constant 0 : i32
    %c0_i32_0 = arith.constant 0 : i32
    %c0_i32_1 = arith.constant 0 : i32
    return %c0_i32, %c0_i32_0 : i32, i32
  }
  func.func @transform_2(%arg0: i32) -> (i32, i32) {
    %c0_i32 = arith.constant 0 : i32
    %c0_i32_0 = arith.constant 0 : i32
    %c0_i32_1 = arith.constant 0 : i32
    return %c0_i32, %c0_i32_0 : i32, i32
  }
  func.func @transform_3(%arg0: i32) -> (i32, i32) {
    %c0_i32 = arith.constant 0 : i32
    %c0_i32_0 = arith.constant 0 : i32
    %c0_i32_1 = arith.constant 0 : i32
    return %c0_i32, %c0_i32_0 : i32, i32
  }
  func.func @transform_4(%arg0: i32) -> (i32, i32) {
    %c0_i32 = arith.constant 0 : i32
    %c0_i32_0 = arith.constant 0 : i32
    %c0_i32_1 = arith.constant 0 : i32
    return %c0_i32, %c0_i32_0 : i32, i32
  }
  func.func @transform_5(%arg0: i32) -> (i32, i32) {
    %c0_i32 = arith.constant 0 : i32
    %c0_i32_0 = arith.constant 0 : i32
    %c0_i32_1 = arith.constant 0 : i32
    return %c0_i32, %c0_i32_0 : i32, i32
  }
  func.func @transform_6(%arg0: i32) -> (i32, i32) {
    %c0_i32 = arith.constant 0 : i32
    %c0_i32_0 = arith.constant 0 : i32
    %c0_i32_1 = arith.constant 0 : i32
    return %c0_i32, %c0_i32_0 : i32, i32
  }
  func.func @transform_7(%arg0: i32) -> (i32, i32) {
    %c0_i32 = arith.constant 0 : i32
    %c0_i32_0 = arith.constant 0 : i32
    %c0_i32_1 = arith.constant 0 : i32
    return %c0_i32, %c0_i32_0 : i32, i32
  }
  func.func @transform_8(%arg0: i32) -> (i32, i32) {
    %c0_i32 = arith.constant 0 : i32
    %c0_i32_0 = arith.constant 0 : i32
    %c0_i32_1 = arith.constant 0 : i32
    return %c0_i32, %c0_i32_0 : i32, i32
  }
  func.func @transform_9(%arg0: i32) -> (i32, i32) {
    %c0_i32 = arith.constant 0 : i32
    %c0_i32_0 = arith.constant 0 : i32
    %c0_i32_1 = arith.constant 0 : i32
    return %c0_i32, %c0_i32_0 : i32, i32
  }
  func.func @transform_10(%arg0: i32) -> (i32, i32) {
    %c0_i32 = arith.constant 0 : i32
    %c0_i32_0 = arith.constant 0 : i32
    %c0_i32_1 = arith.constant 0 : i32
    return %c0_i32, %c0_i32_0 : i32, i32
  }
  func.func @transform_11(%arg0: i32) -> (i32, i32) {
    %c0_i32 = arith.constant 0 : i32
    %c0_i32_0 = arith.constant 0 : i32
    %c0_i32_1 = arith.constant 0 : i32
    return %c0_i32, %c0_i32_0 : i32, i32
  }
  func.func @transform_12(%arg0: i32) -> (i32, i32, i32) {
    %c0_i32 = arith.constant 0 : i32
    %c0_i32_0 = arith.constant 0 : i32
    %c0_i32_1 = arith.constant 0 : i32
    %c0_i32_2 = arith.constant 0 : i32
    return %c0_i32, %c0_i32_0, %c0_i32_1 : i32, i32, i32
  }
}

</mosaic_0001>

<llo_original>
// kernel: _lambda_.1
$region0: #{_lambda_.1}
  #allocation0 [shape = 'u32[]', space=smem, size = 0x4, offset = 0x4, fixed_abs, tag = 'smem constant byte address 0x4 - core index']
  #allocation1 [shape = 'u32[144,128]{1,0:T(1,128)}', space=vmem, size = 0x12000, scoped, tag = 'internal scratch']
  %s0 = inlined_call_operand.vmem [shape: f32[16,3], index: 0, kind: input, shape index: {}]
  %s1 = inlined_call_operand.vmem [shape: f32[16,3], index: 1, kind: input, shape index: {}]
  %s2 = inlined_call_operand.vmem [shape: f32[16,32], index: 2, kind: input, shape index: {}]
  %s3 = inlined_call_operand.vmem [shape: f32[16,32], index: 3, kind: input, shape index: {}]
  %s4 = inlined_call_operand.vmem [shape: f32[32,160], index: 4, kind: input, shape index: {}]
  %s5 = inlined_call_operand.vmem [shape: f32[9,96], index: 5, kind: input, shape index: {}]
  %s6 = inlined_call_operand.vmem [shape: f32[96,96], index: 6, kind: input, shape index: {}]
  %s7 = inlined_call_operand.vmem [shape: f32[32,32], index: 7, kind: input, shape index: {}]
  %s8 = inlined_call_operand.vmem [shape: f32[64,128], index: 8, kind: input, shape index: {}]
  %s9 = inlined_call_operand.vmem [shape: f32[32,32], index: 9, kind: input, shape index: {}]
  %s10 = inlined_call_operand.vmem [shape: f32[32,3], index: 10, kind: input, shape index: {}]
  %s11 = inlined_call_operand.vmem [shape: f32[11,128], index: 11, kind: input, shape index: {}]
  %s12 = inlined_call_operand.vmem [shape: f32[4,16,3], index: 12, kind: output, shape index: {}]
  %s13 = sld [smem:[#allocation0]]
  $region65: #{_lambda_.1} parent=0
    _
  %s15 = ssub.s32 1, %s13
  %s16 = scalar_select 0, %s15, %s13
  // Predicated region
  $region2: #{_lambda_.1} parent=0 // pred_check
    _
  $region3: #{_lambda_.1} parent=0 // pred_check_branch
    %18 = sbr.rel (0) target = $region5
  $region4: #{_lambda_.1} parent=0 // pred_region
    _
  $region5: #{_lambda_.1} parent=0 // pred_fallthru
    _
  // Predicated region
  $region6: #{_lambda_.1} parent=0 // pred_check
    _
  $region7: #{_lambda_.1} parent=0 // pred_check_branch
    %20 = sbr.rel (0) target = $region9
  $region8: #{_lambda_.1} parent=0 // pred_region
    _
  $region9: #{_lambda_.1} parent=0 // pred_fallthru
    _
  // Predicated region
  $region10: #{_lambda_.1} parent=0 // pred_check
    _
  $region11: #{_lambda_.1} parent=0 // pred_check_branch
    %22 = sbr.rel (0) target = $region13
  $region12: #{_lambda_.1} parent=0 // pred_region
    _
  $region13: #{_lambda_.1} parent=0 // pred_fallthru
    _
  // Predicated region
  $region14: #{_lambda_.1} parent=0 // pred_check
    _
  $region15: #{_lambda_.1} parent=0 // pred_check_branch
    %24 = sbr.rel (0) target = $region17
  $region16: #{_lambda_.1} parent=0 // pred_region
    _
  $region17: #{_lambda_.1} parent=0 // pred_fallthru
    _
  // Predicated region
  $region18: #{_lambda_.1} parent=0 // pred_check
    _
  $region19: #{_lambda_.1} parent=0 // pred_check_branch
    %26 = sbr.rel (0) target = $region21
  $region20: #{_lambda_.1} parent=0 // pred_region
    _
  $region21: #{_lambda_.1} parent=0 // pred_fallthru
    _
  // Predicated region
  $region22: #{_lambda_.1} parent=0 // pred_check
    _
  $region23: #{_lambda_.1} parent=0 // pred_check_branch
    %28 = sbr.rel (0) target = $region25
  $region24: #{_lambda_.1} parent=0 // pred_region
    _
  $region25: #{_lambda_.1} parent=0 // pred_fallthru
    _
  // Predicated region
  $region26: #{_lambda_.1} parent=0 // pred_check
    _
  $region27: #{_lambda_.1} parent=0 // pred_check_branch
    %30 = sbr.rel (0) target = $region29
  $region28: #{_lambda_.1} parent=0 // pred_region
    _
  $region29: #{_lambda_.1} parent=0 // pred_fallthru
    _
  // Predicated region
  $region30: #{_lambda_.1} parent=0 // pred_check
    _
  $region31: #{_lambda_.1} parent=0 // pred_check_branch
    %32 = sbr.rel (0) target = $region33
  $region32: #{_lambda_.1} parent=0 // pred_region
    _
  $region33: #{_lambda_.1} parent=0 // pred_fallthru
    _
  // Predicated region
  $region34: #{_lambda_.1} parent=0 // pred_check
    _
  $region35: #{_lambda_.1} parent=0 // pred_check_branch
    %34 = sbr.rel (0) target = $region37
  $region36: #{_lambda_.1} parent=0 // pred_region
    _
  $region37: #{_lambda_.1} parent=0 // pred_fallthru
    _
  // Predicated region
  $region38: #{_lambda_.1} parent=0 // pred_check
    _
  $region39: #{_lambda_.1} parent=0 // pred_check_branch
    %36 = sbr.rel (0) target = $region41
  $region40: #{_lambda_.1} parent=0 // pred_region
    _
  $region41: #{_lambda_.1} parent=0 // pred_fallthru
    _
  // Predicated region
  $region42: #{_lambda_.1} parent=0 // pred_check
    _
  $region43: #{_lambda_.1} parent=0 // pred_check_branch
    %38 = sbr.rel (0) target = $region45
  $region44: #{_lambda_.1} parent=0 // pred_region
    _
  $region45: #{_lambda_.1} parent=0 // pred_fallthru
    _
  // Predicated region
  $region46: #{_lambda_.1} parent=0 // pred_check
    _
  $region47: #{_lambda_.1} parent=0 // pred_check_branch
    %40 = sbr.rel (0) target = $region49
  $region48: #{_lambda_.1} parent=0 // pred_region
    _
  $region49: #{_lambda_.1} parent=0 // pred_fallthru
    _
  %v41 = vlaneseq
  %v42 = vshrl.u32 %v41, 7
  %v43 = vadd.s32 %v42, 8
  %vm44 = vcmp.eq.s32.totalorder %v42, 0
  %vm45 = vcmp.eq.s32.totalorder %v43, 0
  %vm46 = vcmp.eq.s32.totalorder %v42, 15
  %vm47 = vcmp.eq.s32.totalorder %v43, 15
  %v48 = vld [vmem:[%s2] sm:$0xff]
  %v49 = vld [vmem:[%s2 + $0x8] sm:$0xff]
  %v50 = vld [vmem:[%s1] sm:$0xff]
  %v51 = vld [vmem:[%s1 + $0x8] sm:$0xff]
  loop: start=0, step=1, limit=4
  $region50: #{_lambda_.1} parent=0 // loop_pre_header
    _
  $region51: #{_lambda_.1} parent=0 // loop_header
    %s53 = sphi 0, %s57
    %p54 = scmp.ge.s32.totalorder %s53, 4
    %v58 = vphi %v48, %v1234
    %v59 = vphi %v49, %v1236
    %v60 = vphi %v50, %v1454
    %v61 = vphi %v51, %v1455
  $region52: #{_lambda_.1} parent=0 // loop_header_branch
    %56 = sbr.rel (%p54) target = $region56
  $region53: #{_lambda_.1} parent=0 // loop_body
    %v62 = vld [vmem:[%s0] sm:$0xff]
    %v63 = vld [vmem:[%s0 + $0x8] sm:$0xff]
    %v64 = vmul.f32 %v60, -1.0
    %v65 = vmul.f32 %v61, -1.0
    %v66 = vadd.f32 %v64, 28.0
    %v67 = vadd.f32 %v65, 28.0
    %v68 = vmul.f32 %v66, 0.02
    %v69 = vmul.f32 %v67, 0.02
    %v70 = vmul.f32 %v60, 0.02
    %v71 = vmul.f32 %v61, 0.02
    %v72 = vmul.f32 %v68, 0.2
    %v73 = vmul.f32 %v69, 0.2
    %v74 = vmul.f32 %v70, 0.2
    %v75 = vmul.f32 %v71, 0.2
    %v76 = vmul.f32 %v72, 0.2
    %v77 = vmul.f32 %v73, 0.2
    %v78 = vadd.f32 %v76, -0.192
    %v79 = vadd.f32 %v77, -0.192
    %v80 = vmul.f32 %v68, 0.96
    %v81 = vmul.f32 %v69, 0.96
    %v82 = vmul.f32 %v72, -0.02
    %v83 = vmul.f32 %v73, -0.02
    %v84 = vadd.f32 %v80, %v82
    %v85 = vadd.f32 %v81, %v83
    %v86 = vmul.f32 %v68, 0.04
    %v87 = vmul.f32 %v69, 0.04
    %v88 = vadd.f32 %v86, -0.01992
    %v89 = vadd.f32 %v87, -0.01992
    %v90 = vmul.f32 %v70, 0.96
    %v91 = vmul.f32 %v71, 0.96
    %v92 = vmul.f32 %v74, -0.053333335
    %v93 = vmul.f32 %v75, -0.053333335
    %v94 = vadd.f32 %v90, %v92
    %v95 = vadd.f32 %v91, %v93
    %v96 = vmul.f32 %v70, 0.04
    %v97 = vmul.f32 %v71, 0.04
    %v98 = vmul.f32 %v78, 0.25
    %v99 = vmul.f32 %v79, 0.25
    %v100 = vadd.f32 %v98, 1.0
    %v101 = vadd.f32 %v99, 1.0
    %v102 = vmul.f32 %v84, 0.25
    %v103 = vmul.f32 %v85, 0.25
    %v104 = vmul.f32 %v88, 0.25
    %v105 = vmul.f32 %v89, 0.25
    %v106 = vadd.f32 %v104, 1.0
    %v107 = vadd.f32 %v105, 1.0
    %v108 = vmul.f32 %v94, 0.25
    %v109 = vmul.f32 %v95, 0.25
    %v110 = vmul.f32 %v96, 0.25
    %v111 = vmul.f32 %v97, 0.25
    %v112 = vmul.f32 %v100, -0.2
    %v113 = vmul.f32 %v101, -0.2
    %v114 = vmul.f32 %v102, 0.2
    %v115 = vmul.f32 %v103, 0.2
    %v116 = vadd.f32 %v112, %v114
    %v117 = vadd.f32 %v113, %v115
    %v118 = vmul.f32 %v106, 0.2
    %v119 = vmul.f32 %v107, 0.2
    %v120 = vadd.f32 %v118, -0.00956
    %v121 = vadd.f32 %v119, -0.00956
    %v122 = vmul.f32 %v68, %v100
    %v123 = vmul.f32 %v69, %v101
    %v124 = vmul.f32 %v102, -0.02
    %v125 = vmul.f32 %v103, -0.02
    %v126 = vadd.f32 %v122, %v124
    %v127 = vadd.f32 %v123, %v125
    %v128 = vmul.f32 %v68, 0.0478
    %v129 = vmul.f32 %v69, 0.0478
    %v130 = vmul.f32 %v106, -0.02
    %v131 = vmul.f32 %v107, -0.02
    %v132 = vadd.f32 %v128, %v130
    %v133 = vadd.f32 %v129, %v131
    %136 = vrot.lane.b32.xlu0 %v100, 127
    %v137 = vpop.permute.xlu0 %136
    %138 = vrot.lane.b32.xlu0 %v101, 127
    %v139 = vpop.permute.xlu0 %138
    %v142 = vmul.f32 %v70, %v137
    %v143 = vmul.f32 %v71, %v139
    %v144 = vmul.f32 %v108, -0.053333335
    %v145 = vmul.f32 %v109, -0.053333335
    %v146 = vadd.f32 %v142, %v144
    %v147 = vadd.f32 %v143, %v145
    %v148 = vmul.f32 %v70, 0.0478
    %v149 = vmul.f32 %v71, 0.0478
    %v150 = vmul.f32 %v110, -0.053333335
    %v151 = vmul.f32 %v111, -0.053333335
    %v152 = vadd.f32 %v148, %v150
    %v153 = vadd.f32 %v149, %v151
    %v154 = vmul.f32 %v116, 0.33333334
    %v155 = vmul.f32 %v117, 0.33333334
    %v156 = vadd.f32 %v154, 1.0
    %v157 = vadd.f32 %v155, 1.0
    %v158 = vmul.f32 %v120, 0.33333334
    %v159 = vmul.f32 %v121, 0.33333334
    %v160 = vmul.f32 %v126, 0.33333334
    %v161 = vmul.f32 %v127, 0.33333334
    %v162 = vmul.f32 %v132, 0.33333334
    %v163 = vmul.f32 %v133, 0.33333334
    %v164 = vadd.f32 %v162, 1.0
    %v165 = vadd.f32 %v163, 1.0
    %v166 = vmul.f32 %v146, 0.33333334
    %v167 = vmul.f32 %v147, 0.33333334
    %v168 = vmul.f32 %v152, 0.33333334
    %v169 = vmul.f32 %v153, 0.33333334
    %v170 = vmul.f32 %v156, -0.2
    %v171 = vmul.f32 %v157, -0.2
    %v172 = vmul.f32 %v160, 0.2
    %v173 = vmul.f32 %v161, 0.2
    %v174 = vadd.f32 %v170, %v172
    %v175 = vadd.f32 %v171, %v173
    %v176 = vmul.f32 %v158, -0.2
    %v177 = vmul.f32 %v159, -0.2
    %v178 = vmul.f32 %v164, 0.2
    %v179 = vmul.f32 %v165, 0.2
    %v180 = vadd.f32 %v176, %v178
    %v181 = vadd.f32 %v177, %v179
    %v182 = vmul.f32 %v68, %v156
    %v183 = vmul.f32 %v69, %v157
    %v184 = vmul.f32 %v160, -0.02
    %v185 = vmul.f32 %v161, -0.02
    %v186 = vadd.f32 %v182, %v184
    %v187 = vadd.f32 %v183, %v185
    %v188 = vmul.f32 %v68, %v158
    %v189 = vmul.f32 %v69, %v159
    %v190 = vmul.f32 %v164, -0.02
    %v191 = vmul.f32 %v165, -0.02
    %v192 = vadd.f32 %v188, %v190
    %v193 = vadd.f32 %v189, %v191
    %196 = vrot.lane.b32.xlu0 %v156, 127
    %v197 = vpop.permute.xlu0 %196
    %198 = vrot.lane.b32.xlu0 %v157, 127
    %v199 = vpop.permute.xlu0 %198
    %v202 = vmul.f32 %v70, %v197
    %v203 = vmul.f32 %v71, %v199
    %v204 = vmul.f32 %v166, -0.053333335
    %v205 = vmul.f32 %v167, -0.053333335
    %v206 = vadd.f32 %v202, %v204
    %v207 = vadd.f32 %v203, %v205
    %210 = vrot.lane.b32.xlu0 %v158, 127
    %v211 = vpop.permute.xlu0 %210
    %212 = vrot.lane.b32.xlu0 %v159, 127
    %v213 = vpop.permute.xlu0 %212
    %v216 = vmul.f32 %v70, %v211
    %v217 = vmul.f32 %v71, %v213
    %v218 = vmul.f32 %v168, -0.053333335
    %v219 = vmul.f32 %v169, -0.053333335
    %v220 = vadd.f32 %v216, %v218
    %v221 = vadd.f32 %v217, %v219
    %v222 = vmul.f32 %v174, 0.5
    %v223 = vmul.f32 %v175, 0.5
    %v224 = vadd.f32 %v222, 1.0
    %v225 = vadd.f32 %v223, 1.0
    %v226 = vmul.f32 %v180, 0.5
    %v227 = vmul.f32 %v181, 0.5
    %v228 = vmul.f32 %v186, 0.5
    %v229 = vmul.f32 %v187, 0.5
    %v230 = vmul.f32 %v192, 0.5
    %v231 = vmul.f32 %v193, 0.5
    %v232 = vadd.f32 %v230, 1.0
    %v233 = vadd.f32 %v231, 1.0
    %v234 = vmul.f32 %v206, 0.5
    %v235 = vmul.f32 %v207, 0.5
    %v236 = vmul.f32 %v220, 0.5
    %v237 = vmul.f32 %v221, 0.5
    %v238 = vmul.f32 %v224, -0.2
    %v239 = vmul.f32 %v225, -0.2
    %v240 = vmul.f32 %v228, 0.2
    %v241 = vmul.f32 %v229, 0.2
    %v242 = vadd.f32 %v238, %v240
    %v243 = vadd.f32 %v239, %v241
    %v244 = vmul.f32 %v226, -0.2
    %v245 = vmul.f32 %v227, -0.2
    %v246 = vmul.f32 %v232, 0.2
    %v247 = vmul.f32 %v233, 0.2
    %v248 = vadd.f32 %v244, %v246
    %v249 = vadd.f32 %v245, %v247
    %v250 = vmul.f32 %v68, %v224
    %v251 = vmul.f32 %v69, %v225
    %v252 = vmul.f32 %v228, -0.02
    %v253 = vmul.f32 %v229, -0.02
    %v254 = vadd.f32 %v250, %v252
    %v255 = vadd.f32 %v251, %v253
    %v256 = vmul.f32 %v68, %v226
    %v257 = vmul.f32 %v69, %v227
    %v258 = vmul.f32 %v232, -0.02
    %v259 = vmul.f32 %v233, -0.02
    %v260 = vadd.f32 %v256, %v258
    %v261 = vadd.f32 %v257, %v259
    %264 = vrot.lane.b32.xlu0 %v224, 127
    %v265 = vpop.permute.xlu0 %264
    %266 = vrot.lane.b32.xlu0 %v225, 127
    %v267 = vpop.permute.xlu0 %266
    %v270 = vmul.f32 %v70, %v265
    %v271 = vmul.f32 %v71, %v267
    %v272 = vmul.f32 %v234, -0.053333335
    %v273 = vmul.f32 %v235, -0.053333335
    %v274 = vadd.f32 %v270, %v272
    %v275 = vadd.f32 %v271, %v273
    %278 = vrot.lane.b32.xlu0 %v226, 127
    %v279 = vpop.permute.xlu0 %278
    %280 = vrot.lane.b32.xlu0 %v227, 127
    %v281 = vpop.permute.xlu0 %280
    %v284 = vmul.f32 %v70, %v279
    %v285 = vmul.f32 %v71, %v281
    %v286 = vmul.f32 %v236, -0.053333335
    %v287 = vmul.f32 %v237, -0.053333335
    %v288 = vadd.f32 %v284, %v286
    %v289 = vadd.f32 %v285, %v287
    %v290 = vadd.f32 %v242, 1.0
    %v291 = vadd.f32 %v243, 1.0
    %v292 = vadd.f32 %v260, 1.0
    %v293 = vadd.f32 %v261, 1.0
    %vm296 = vcmask 1046528
    %v297 = vrot.slane %v60, 1
    %v298 = vrot.slane %v61, 1
    %v299 = vsel %vm296, %v297, %v298
    %v302 = vsel %vm296, %v298, %v61
    %303 = vrot.lane.b32.xlu0 %v60, 2
    %v304 = vpop.permute.xlu0 %303
    %305 = vrot.lane.b32.xlu0 %v61, 2
    %v306 = vpop.permute.xlu0 %305
    %v309 = vmul.f32 %v290, %v304
    %v310 = vmul.f32 %v291, %v306
    %311 = vrot.lane.b32.xlu0 %v60, 1
    %v312 = vpop.permute.xlu0 %311
    %313 = vrot.lane.b32.xlu0 %v61, 1
    %v314 = vpop.permute.xlu0 %313
    %v317 = vmul.f32 %v248, %v312
    %v318 = vmul.f32 %v249, %v314
    %v319 = vadd.f32 %v309, %v317
    %v320 = vadd.f32 %v310, %v318
    %v321 = vmul.f32 %v254, %v304
    %v322 = vmul.f32 %v255, %v306
    %v323 = vmul.f32 %v292, %v312
    %v324 = vmul.f32 %v293, %v314
    %v325 = vadd.f32 %v321, %v323
    %v326 = vadd.f32 %v322, %v324
    %v327 = vmul.f32 %v274, %v312
    %v328 = vmul.f32 %v275, %v314
    %v329 = vmul.f32 %v288, %v60
    %v330 = vmul.f32 %v289, %v61
    %v331 = vadd.f32 %v327, %v329
    %v332 = vadd.f32 %v328, %v330
    %v333 = vmul.f32 %v60, 0.9480639
    %v334 = vmul.f32 %v61, 0.9480639
    %337 = vrot.lane.b32.xlu0 %v333, 127
    %v338 = vpop.permute.xlu0 %337
    %339 = vrot.lane.b32.xlu0 %v334, 127
    %v340 = vpop.permute.xlu0 %339
    %v343 = vadd.f32 %v331, %v338
    %v344 = vadd.f32 %v332, %v340
    %347 = vrot.lane.b32.xlu0 %v319, 126
    %v348 = vpop.permute.xlu0 %347
    %349 = vrot.lane.b32.xlu0 %v320, 126
    %v350 = vpop.permute.xlu0 %349
    %v353 = vsub.f32 %v299, %v348
    %v354 = vsub.f32 %v302, %v350
    %357 = vrot.lane.b32.xlu0 %v325, 127
    %v358 = vpop.permute.xlu0 %357
    %359 = vrot.lane.b32.xlu0 %v326, 127
    %v360 = vpop.permute.xlu0 %359
    %v363 = vsub.f32 %v299, %v358
    %v364 = vsub.f32 %v302, %v360
    %367 = vrot.lane.b32.xlu0 %v343, 1
    %v368 = vpop.permute.xlu0 %367
    %369 = vrot.lane.b32.xlu0 %v344, 1
    %v370 = vpop.permute.xlu0 %369
    %v373 = vsub.f32 %v299, %v368
    %v374 = vsub.f32 %v302, %v370
    %vm375 = vcmask 7168
    %v376 = vsel %vm375, %v353, %v363
    %v377 = vsel %vm375, %v354, %v364
    %vm378 = vcmask 15360
    %v379 = vsel %vm378, %v376, %v373
    %v380 = vsel %vm378, %v377, %v374
    %vm383 = vcmask 1040384
    %v384 = vrot.slane %v379, 7
    %v385 = vrot.slane %v380, 7
    %v386 = vsel %vm383, %v384, %v385
    %v389 = vsel %vm383, %v379, %v384
    %v390 = vsub.f32 0.0, %v389
    %v391 = vsub.f32 0.0, %v386
    %v392 = vsel %vm44, 1, 0
    %v393 = vsel %vm45, 1, 0
    %vm394 = vcmp.eq.s32.totalorder %v392, 1
    %vm395 = vcmp.eq.s32.totalorder %v393, 1
    %v396 = vsel %vm394, 0.0, %v390
    %v397 = vsel %vm395, 0.0, %v391
    %400 = vrot.lane.b32.xlu0 %v353, 2
    %v401 = vpop.permute.xlu0 %400
    %402 = vrot.lane.b32.xlu0 %v354, 2
    %v403 = vpop.permute.xlu0 %402
    %v406 = vmul.f32 %v290, %v401
    %v407 = vmul.f32 %v291, %v403
    %410 = vrot.lane.b32.xlu0 %v363, 1
    %v411 = vpop.permute.xlu0 %410
    %412 = vrot.lane.b32.xlu0 %v364, 1
    %v413 = vpop.permute.xlu0 %412
    %v416 = vmul.f32 %v254, %v411
    %v417 = vmul.f32 %v255, %v413
    %v418 = vadd.f32 %v406, %v416
    %v419 = vadd.f32 %v407, %v417
    %422 = vrot.lane.b32.xlu0 %v373, 127
    %v423 = vpop.permute.xlu0 %422
    %424 = vrot.lane.b32.xlu0 %v374, 127
    %v425 = vpop.permute.xlu0 %424
    %v428 = vmul.f32 %v274, %v423
    %v429 = vmul.f32 %v275, %v425
    %432 = vrot.lane.b32.xlu0 %v428, 1
    %v433 = vpop.permute.xlu0 %432
    %434 = vrot.lane.b32.xlu0 %v429, 1
    %v435 = vpop.permute.xlu0 %434
    %v438 = vadd.f32 %v418, %v433
    %v439 = vadd.f32 %v419, %v435
    %v440 = vmul.f32 %v248, %v401
    %v441 = vmul.f32 %v249, %v403
    %v442 = vmul.f32 %v292, %v411
    %v443 = vmul.f32 %v293, %v413
    %v444 = vadd.f32 %v440, %v442
    %v445 = vadd.f32 %v441, %v443
    %v446 = vmul.f32 %v288, %v423
    %v447 = vmul.f32 %v289, %v425
    %450 = vrot.lane.b32.xlu0 %v446, 1
    %v451 = vpop.permute.xlu0 %450
    %452 = vrot.lane.b32.xlu0 %v447, 1
    %v453 = vpop.permute.xlu0 %452
    %v456 = vadd.f32 %v444, %v451
    %v457 = vadd.f32 %v445, %v453
    %v458 = vmul.f32 %v373, 0.9480639
    %v459 = vmul.f32 %v374, 0.9480639
    %462 = vrot.lane.b32.xlu0 %v438, 126
    %v463 = vpop.permute.xlu0 %462
    %464 = vrot.lane.b32.xlu0 %v439, 126
    %v465 = vpop.permute.xlu0 %464
    %470 = vrot.lane.b32.xlu0 %v456, 127
    %v471 = vpop.permute.xlu0 %470
    %472 = vrot.lane.b32.xlu0 %v457, 127
    %v473 = vpop.permute.xlu0 %472
    %v476 = vsel %vm375, %v463, %v471
    %v477 = vsel %vm375, %v465, %v473
    %v478 = vsel %vm378, %v476, %v458
    %v479 = vsel %vm378, %v477, %v459
    %v480 = vsel %vm46, 1, 0
    %v481 = vsel %vm47, 1, 0
    %vm482 = vcmp.eq.s32.totalorder %v480, 1
    %vm483 = vcmp.eq.s32.totalorder %v481, 1
    %v484 = vsel %vm482, 0.0, %v478
    %v485 = vsel %vm483, 0.0, %v479
    %v486 = vsub.f32 %v62, %v60
    %v487 = vsub.f32 %v63, %v61
    %v488 = vsel %vm378, %v486, %v486
    %v489 = vsel %vm378, %v487, %v487
    %v490 = vadd.f32 %v396, %v488
    %v491 = vadd.f32 %v397, %v489
    %v492 = vadd.f32 %v490, %v484
    %v493 = vadd.f32 %v491, %v485
    %v494 = vld [vmem:[%s4] sm:$0xff]
    %v495 = vld [vmem:[%s4 + $0x8] sm:$0xff]
    %v496 = vld [vmem:[%s4 + $0x10] sm:$0xff]
    %v497 = vld [vmem:[%s4 + $0x18] sm:$0xff]
    %v498 = vld [vmem:[%s4 + $0x20] sm:$0xff]
    %v499 = vld [vmem:[%s4 + $0x28] sm:$0xff]
    %v500 = vld [vmem:[%s4 + $0x30] sm:$0xff]
    %v501 = vld [vmem:[%s4 + $0x38] sm:$0xff]
    %vm502 = vcmask 261120
    %v504 = vsel %vm502, %v58, 0
    %v507 = vsel %vm502, %v59, 0
    %509 = vmatprep.subr.mxu0 0.0
    %510 = vmatpush1.msra.mxu0 0.0
    %511 = vmatprep.subr.mxu0 0.0
    %512 = vmatpush1.msra.mxu0 0.0
    %513 = vmatprep.subr.mxu0 0.0
    %514 = vmatpush1.msra.mxu0 0.0
    %515 = vmatprep.subr.mxu0 0.0
    %516 = vmatpush1.msra.mxu0 0.0
    %517 = vmatprep.subr.mxu0 0.0
    %518 = vmatpush1.msra.mxu0 0.0
    %519 = vmatprep.subr.mxu0 0.0
    %520 = vmatpush1.msra.mxu0 0.0
    %521 = vmatprep.subr.mxu0 0.0
    %522 = vmatpush1.msra.mxu0 0.0
    %523 = vmatprep.subr.mxu0 0.0
    %524 = vmatpush1.msra.mxu0 0.0
    %525 = vmatprep.subr.mxu0 0.0
    %526 = vmatpush1.msra.mxu0 0.0
    %527 = vmatprep.subr.mxu0 0.0
    %528 = vmatpush1.msra.mxu0 0.0
    %529 = vmatprep.subr.mxu0 0.0
    %530 = vmatpush1.msra.mxu0 0.0
    %531 = vmatprep.subr.mxu0 0.0
    %532 = vmatpush1.msra.mxu0 0.0
    %533 = vmatprep.subr.mxu0 %v501
    %534 = vmatpush1.msra.mxu0 %v500
    %535 = vmatprep.subr.mxu0 %v499
    %536 = vmatpush1.msra.mxu0 %v498
    %537 = vmatprep.subr.mxu0 %v497
    %538 = vmatpush1.msra.mxu0 %v496
    %539 = vmatprep.subr.mxu0 %v495
    %540 = vmatpush1.msra.mxu0 %v494
    %541 = vmatprep.subr.mxu0 0.0
    %542 = vmatpush2.msra.mxu0 0.0
    %543 = vmatprep.subr.mxu0 0.0
    %544 = vmatpush2.msra.mxu0 0.0
    %545 = vmatprep.subr.mxu0 0.0
    %546 = vmatpush2.msra.mxu0 0.0
    %547 = vmatprep.subr.mxu0 0.0
    %548 = vmatpush2.msra.mxu0 0.0
    %549 = vmatprep.subr.mxu0 0.0
    %550 = vmatpush2.msra.mxu0 0.0
    %551 = vmatprep.subr.mxu0 0.0
    %552 = vmatpush2.msra.mxu0 0.0
    %553 = vmatprep.subr.mxu0 0.0
    %554 = vmatpush2.msra.mxu0 0.0
    %555 = vmatprep.subr.mxu0 0.0
    %556 = vmatpush2.msra.mxu0 0.0
    %557 = vmatprep.subr.mxu0 0.0
    %558 = vmatpush2.msra.mxu0 0.0
    %559 = vmatprep.subr.mxu0 0.0
    %560 = vmatpush2.msra.mxu0 0.0
    %561 = vmatprep.subr.mxu0 0.0
    %562 = vmatpush2.msra.mxu0 0.0
    %563 = vmatprep.subr.mxu0 0.0
    %564 = vmatpush2.msra.mxu0 0.0
    %565 = vmatprep.subr.mxu0 0.0
    %566 = vmatpush2.msra.mxu0 0.0
    %567 = vmatprep.subr.mxu0 0.0
    %568 = vmatpush2.msra.mxu0 0.0
    %569 = vmatprep.subr.mxu0 0.0
    %570 = vmatpush2.msra.mxu0 0.0
    %571 = vmatprep.subr.mxu0 0.0
    %572 = vmatpush2.msra.mxu0 0.0
    %573 = vmatprep.mubr.f32.mxu0 0.0
    %574 = vmatmul.mubr.f32.gmra.mxu0 %v504
    %v575 = vpop.f32.mrf.mxu0
    %v576 = vadd.f32 0.0, %v575
    %v577 = vpop.f32.mrf.mxu0
    %v578 = vadd.f32 0.0, %v577
    %579 = vmatprep.mubr.f32.mxu0 0.0
    %580 = vmatmul.mubr.f32.gmra.mxu0 %v507
    %v581 = vpop.f32.mrf.mxu0
    %v582 = vadd.f32 0.0, %v581
    %v583 = vpop.f32.mrf.mxu0
    %v584 = vadd.f32 0.0, %v583
    %585 = vdwg.mxu0
    %588 = vrot.lane.b32.xlu0 %v488, 3
    %v589 = vpop.permute.xlu0 %588
    %590 = vrot.lane.b32.xlu0 %v489, 3
    %v591 = vpop.permute.xlu0 %590
    %596 = vrot.lane.b32.xlu0 %v484, 6
    %v597 = vpop.permute.xlu0 %596
    %598 = vrot.lane.b32.xlu0 %v485, 6
    %v599 = vpop.permute.xlu0 %598
    %vm602 = vcmask 23552
    %v603 = vsel %vm602, %v396, %v589
    %v604 = vsel %vm602, %v397, %v591
    %vm605 = vcmask 48128
    %v606 = vsel %vm605, %v603, %v597
    %v607 = vsel %vm605, %v604, %v599
    %v608 = vld [vmem:[%s5] sm:$0xff]
    %v609 = vld [vmem:[%s5 + $0x8] sm:$0x1]
    %vm610 = vcmask 72704
    %v612 = vsel %vm610, %v606, 0
    %v615 = vsel %vm610, %v607, 0
    %v618 = vsel %vm383, %v609, 0
    %620 = vmatprep.subr.mxu0 0.0
    %621 = vmatpush1.msra.mxu0 0.0
    %622 = vmatprep.subr.mxu0 0.0
    %623 = vmatpush1.msra.mxu0 0.0
    %624 = vmatprep.subr.mxu0 0.0
    %625 = vmatpush1.msra.mxu0 0.0
    %626 = vmatprep.subr.mxu0 0.0
    %627 = vmatpush1.msra.mxu0 0.0
    %628 = vmatprep.subr.mxu0 0.0
    %629 = vmatpush1.msra.mxu0 0.0
    %630 = vmatprep.subr.mxu0 0.0
    %631 = vmatpush1.msra.mxu0 0.0
    %632 = vmatprep.subr.mxu0 0.0
    %633 = vmatpush1.msra.mxu0 0.0
    %634 = vmatprep.subr.mxu0 0.0
    %635 = vmatpush1.msra.mxu0 0.0
    %636 = vmatprep.subr.mxu0 0.0
    %637 = vmatpush1.msra.mxu0 0.0
    %638 = vmatprep.subr.mxu0 0.0
    %639 = vmatpush1.msra.mxu0 0.0
    %640 = vmatprep.subr.mxu0 0.0
    %641 = vmatpush1.msra.mxu0 0.0
    %642 = vmatprep.subr.mxu0 0.0
    %643 = vmatpush1.msra.mxu0 0.0
    %644 = vmatprep.subr.mxu0 0.0
    %645 = vmatpush1.msra.mxu0 0.0
    %646 = vmatprep.subr.mxu0 0.0
    %647 = vmatpush1.msra.mxu0 0.0
    %648 = vmatprep.subr.mxu0 0.0
    %649 = vmatpush1.msra.mxu0 %v618
    %650 = vmatprep.subr.mxu0 0.0
    %651 = vmatpush1.msra.mxu0 %v608
    %652 = vmatprep.subr.mxu0 0.0
    %653 = vmatpush2.msra.mxu0 0.0
    %654 = vmatprep.subr.mxu0 0.0
    %655 = vmatpush2.msra.mxu0 0.0
    %656 = vmatprep.subr.mxu0 0.0
    %657 = vmatpush2.msra.mxu0 0.0
    %658 = vmatprep.subr.mxu0 0.0
    %659 = vmatpush2.msra.mxu0 0.0
    %660 = vmatprep.subr.mxu0 0.0
    %661 = vmatpush2.msra.mxu0 0.0
    %662 = vmatprep.subr.mxu0 0.0
    %663 = vmatpush2.msra.mxu0 0.0
    %664 = vmatprep.subr.mxu0 0.0
    %665 = vmatpush2.msra.mxu0 0.0
    %666 = vmatprep.subr.mxu0 0.0
    %667 = vmatpush2.msra.mxu0 0.0
    %668 = vmatprep.subr.mxu0 0.0
    %669 = vmatpush2.msra.mxu0 0.0
    %670 = vmatprep.subr.mxu0 0.0
    %671 = vmatpush2.msra.mxu0 0.0
    %672 = vmatprep.subr.mxu0 0.0
    %673 = vmatpush2.msra.mxu0 0.0
    %674 = vmatprep.subr.mxu0 0.0
    %675 = vmatpush2.msra.mxu0 0.0
    %676 = vmatprep.subr.mxu0 0.0
    %677 = vmatpush2.msra.mxu0 0.0
    %678 = vmatprep.subr.mxu0 0.0
    %679 = vmatpush2.msra.mxu0 0.0
    %680 = vmatprep.subr.mxu0 0.0
    %681 = vmatpush2.msra.mxu0 0.0
    %682 = vmatprep.subr.mxu0 0.0
    %683 = vmatpush2.msra.mxu0 0.0
    %684 = vmatprep.mubr.f32.mxu0 0.0
    %685 = vmatmul.mubr.f32.gmra.mxu0 %v612
    %v686 = vpop.f32.mrf.mxu0
    %v687 = vadd.f32 0.0, %v686
    %v688 = vpop.f32.mrf.mxu0
    %689 = vmatprep.mubr.f32.mxu0 0.0
    %690 = vmatmul.mubr.f32.gmra.mxu0 %v615
    %v691 = vpop.f32.mrf.mxu0
    %v692 = vadd.f32 0.0, %v691
    %v693 = vpop.f32.mrf.mxu0
    %694 = vdwg.mxu0
    %v697 = vrot.slane %v576, 7
    %v698 = vrot.slane %v582, 7
    %v699 = vsel %vm383, %v697, %v698
    %v701 = vsel %vm383, %v576, %v697
    %703 = vrot.lane.b32.xlu0 %v701, 96
    %v704 = vpop.permute.xlu0 %703
    %705 = vrot.lane.b32.xlu0 %v699, 96
    %v706 = vpop.permute.xlu0 %705
    %v709 = vadd.f32 %v576, %v704
    %v710 = vadd.f32 %v582, %v706
    %v711 = vadd.f32 %v709, %v687
    %v712 = vadd.f32 %v710, %v692
    %v713 = vld [vmem:[%s11] sm:$0x1]
    %v714 = vlaneseq
    %v715 = vshrl.u32 %v714, 7
    %v716 = vsub.s32 0, %v715
    %v717 = vrot.slane %v713, %v716
    %v718 = vadd.f32 %v711, %v717
    %v719 = vadd.f32 %v712, %v717
    %v720 = vld [vmem:[%s3] sm:$0xff]
    %v721 = vld [vmem:[%s3 + $0x8] sm:$0xff]
    %724 = vrot.lane.b32.xlu0 %v720, 64
    %v725 = vpop.permute.xlu0 %724
    %726 = vrot.lane.b32.xlu0 %v721, 64
    %v727 = vpop.permute.xlu0 %726
    %v730 = vadd.f32 %v576, %v725
    %v731 = vadd.f32 %v582, %v727
    %734 = vrot.lane.b32.xlu0 %v687, 32
    %v735 = vpop.permute.xlu0 %734
    %736 = vrot.lane.b32.xlu0 %v692, 32
    %v737 = vpop.permute.xlu0 %736
    %v740 = vadd.f32 %v730, %v735
    %v741 = vadd.f32 %v731, %v737
    %v744 = vrot.slane %v578, 1
    %v745 = vrot.slane %v584, 1
    %v746 = vsel %vm296, %v744, %v745
    %v748 = vsel %vm296, %v745, %v584
    %750 = vrot.lane.b32.xlu0 %v746, 96
    %v751 = vpop.permute.xlu0 %750
    %752 = vrot.lane.b32.xlu0 %v748, 96
    %v753 = vpop.permute.xlu0 %752
    %v756 = vadd.f32 %v576, %v751
    %v757 = vadd.f32 %v582, %v753
    %v758 = vadd.f32 %v756, %v735
    %v759 = vadd.f32 %v757, %v737
    %v760 = vld [vmem:[%s11 + $0x1] sm:$0x1]
    %v761 = vlaneseq
    %v762 = vshrl.u32 %v761, 7
    %v763 = vsub.s32 0, %v762
    %v764 = vrot.slane %v760, %v763
    %766 = vrot.lane.b32.xlu0 %v764, 96
    %v767 = vpop.permute.xlu0 %766
    %v769 = vadd.f32 %v758, %v767
    %v770 = vadd.f32 %v759, %v767
    %773 = vrot.lane.b32.xlu0 %v740, 96
    %v774 = vpop.permute.xlu0 %773
    %775 = vrot.lane.b32.xlu0 %v741, 96
    %v776 = vpop.permute.xlu0 %775
    %781 = vrot.lane.b32.xlu0 %v769, 96
    %v782 = vpop.permute.xlu0 %781
    %783 = vrot.lane.b32.xlu0 %v770, 96
    %v784 = vpop.permute.xlu0 %783
    %v787 = vsel %vm502, %v718, %v774
    %v788 = vsel %vm502, %v719, %v776
    %vm789 = vcmask 523264
    %v790 = vsel %vm789, %v787, %v782
    %v791 = vsel %vm789, %v788, %v784
    %vm792 = vcmp.gt.f32.partialorder %v790, 0.0
    %vm793 = vcmp.gt.f32.partialorder %v791, 0.0
    %v794 = vmul.f32 %v790, 0.01
    %v795 = vmul.f32 %v791, 0.01
    %v796 = vsel %vm792, %v790, %v794
    %v797 = vsel %vm793, %v791, %v795
    %v798 = vld [vmem:[%s6] sm:$0xff]
    %v799 = vld [vmem:[%s6 + $0x8] sm:$0xff]
    %v800 = vld [vmem:[%s6 + $0x10] sm:$0xff]
    %v801 = vld [vmem:[%s6 + $0x18] sm:$0xff]
    %v802 = vld [vmem:[%s6 + $0x20] sm:$0xff]
    %v803 = vld [vmem:[%s6 + $0x28] sm:$0xff]
    %v804 = vld [vmem:[%s6 + $0x30] sm:$0xff]
    %v805 = vld [vmem:[%s6 + $0x38] sm:$0xff]
    %v806 = vld [vmem:[%s6 + $0x40] sm:$0xff]
    %v807 = vld [vmem:[%s6 + $0x48] sm:$0xff]
    %v808 = vld [vmem:[%s6 + $0x50] sm:$0xff]
    %v809 = vld [vmem:[%s6 + $0x58] sm:$0xff]
    %v810 = vld [vmem:[%s11 + $0x2] sm:$0x1]
    %v811 = vlaneseq
    %v812 = vshrl.u32 %v811, 7
    %v813 = vsub.s32 0, %v812
    %v814 = vrot.slane %v810, %v813
    %vm815 = vcmask 785408
    %v817 = vsel %vm815, %v796, 0
    %v820 = vsel %vm815, %v797, 0
    %822 = vmatprep.subr.mxu0 0.0
    %823 = vmatpush1.msra.mxu0 0.0
    %824 = vmatprep.subr.mxu0 0.0
    %825 = vmatpush1.msra.mxu0 0.0
    %826 = vmatprep.subr.mxu0 0.0
    %827 = vmatpush1.msra.mxu0 0.0
    %828 = vmatprep.subr.mxu0 0.0
    %829 = vmatpush1.msra.mxu0 0.0
    %830 = vmatprep.subr.mxu0 0.0
    %831 = vmatpush1.msra.mxu0 %v809
    %832 = vmatprep.subr.mxu0 0.0
    %833 = vmatpush1.msra.mxu0 %v808
    %834 = vmatprep.subr.mxu0 0.0
    %835 = vmatpush1.msra.mxu0 %v807
    %836 = vmatprep.subr.mxu0 0.0
    %837 = vmatpush1.msra.mxu0 %v806
    %838 = vmatprep.subr.mxu0 0.0
    %839 = vmatpush1.msra.mxu0 %v805
    %840 = vmatprep.subr.mxu0 0.0
    %841 = vmatpush1.msra.mxu0 %v804
    %842 = vmatprep.subr.mxu0 0.0
    %843 = vmatpush1.msra.mxu0 %v803
    %844 = vmatprep.subr.mxu0 0.0
    %845 = vmatpush1.msra.mxu0 %v802
    %846 = vmatprep.subr.mxu0 0.0
    %847 = vmatpush1.msra.mxu0 %v801
    %848 = vmatprep.subr.mxu0 0.0
    %849 = vmatpush1.msra.mxu0 %v800
    %850 = vmatprep.subr.mxu0 0.0
    %851 = vmatpush1.msra.mxu0 %v799
    %852 = vmatprep.subr.mxu0 0.0
    %853 = vmatpush1.msra.mxu0 %v798
    %854 = vmatprep.subr.mxu0 0.0
    %855 = vmatpush2.msra.mxu0 0.0
    %856 = vmatprep.subr.mxu0 0.0
    %857 = vmatpush2.msra.mxu0 0.0
    %858 = vmatprep.subr.mxu0 0.0
    %859 = vmatpush2.msra.mxu0 0.0
    %860 = vmatprep.subr.mxu0 0.0
    %861 = vmatpush2.msra.mxu0 0.0
    %862 = vmatprep.subr.mxu0 0.0
    %863 = vmatpush2.msra.mxu0 0.0
    %864 = vmatprep.subr.mxu0 0.0
    %865 = vmatpush2.msra.mxu0 0.0
    %866 = vmatprep.subr.mxu0 0.0
    %867 = vmatpush2.msra.mxu0 0.0
    %868 = vmatprep.subr.mxu0 0.0
    %869 = vmatpush2.msra.mxu0 0.0
    %870 = vmatprep.subr.mxu0 0.0
    %871 = vmatpush2.msra.mxu0 0.0
    %872 = vmatprep.subr.mxu0 0.0
    %873 = vmatpush2.msra.mxu0 0.0
    %874 = vmatprep.subr.mxu0 0.0
    %875 = vmatpush2.msra.mxu0 0.0
    %876 = vmatprep.subr.mxu0 0.0
    %877 = vmatpush2.msra.mxu0 0.0
    %878 = vmatprep.subr.mxu0 0.0
    %879 = vmatpush2.msra.mxu0 0.0
    %880 = vmatprep.subr.mxu0 0.0
    %881 = vmatpush2.msra.mxu0 0.0
    %882 = vmatprep.subr.mxu0 0.0
    %883 = vmatpush2.msra.mxu0 0.0
    %884 = vmatprep.subr.mxu0 0.0
    %885 = vmatpush2.msra.mxu0 0.0
    %886 = vmatprep.mubr.f32.mxu0 0.0
    %887 = vmatmul.mubr.f32.gmra.mxu0 %v817
    %v888 = vpop.f32.mrf.mxu0
    %v889 = vadd.f32 %v814, %v888
    %v890 = vpop.f32.mrf.mxu0
    %891 = vmatprep.mubr.f32.mxu0 0.0
    %892 = vmatmul.mubr.f32.gmra.mxu0 %v820
    %v893 = vpop.f32.mrf.mxu0
    %v894 = vadd.f32 %v814, %v893
    %v895 = vpop.f32.mrf.mxu0
    %896 = vdwg.mxu0
    %vm897 = vcmp.gt.f32.partialorder %v889, 0.0
    %vm898 = vcmp.gt.f32.partialorder %v894, 0.0
    %v899 = vmul.f32 %v889, 0.01
    %v900 = vmul.f32 %v894, 0.01
    %v901 = vsel %vm897, %v889, %v899
    %v902 = vsel %vm898, %v894, %v900
    %v903 = vsel %vm394, 0.0, %v901
    %v904 = vsel %vm395, 0.0, %v902
    %907 = vrot.lane.b32.xlu0 %v903, 32
    %v908 = vpop.permute.xlu0 %907
    %909 = vrot.lane.b32.xlu0 %v904, 32
    %v910 = vpop.permute.xlu0 %909
    %v913 = vadd.f32 %v901, %v908
    %v914 = vadd.f32 %v902, %v910
    %v915 = vsel %vm482, 0.0, %v901
    %v916 = vsel %vm483, 0.0, %v902
    %919 = vrot.lane.b32.xlu0 %v915, 96
    %v920 = vpop.permute.xlu0 %919
    %921 = vrot.lane.b32.xlu0 %v916, 96
    %v922 = vpop.permute.xlu0 %921
    %v925 = vadd.f32 %v913, %v920
    %v926 = vadd.f32 %v914, %v922
    %v927 = vld [vmem:[%s7] sm:$0xff]
    %v928 = vld [vmem:[%s7 + $0x8] sm:$0xff]
    %v929 = vld [vmem:[%s7 + $0x10] sm:$0xff]
    %v930 = vld [vmem:[%s7 + $0x18] sm:$0xff]
    %v931 = vld [vmem:[%s11 + $0x3] sm:$0x1]
    %v932 = vlaneseq
    %v933 = vshrl.u32 %v932, 7
    %v934 = vsub.s32 0, %v933
    %v935 = vrot.slane %v931, %v934
    %938 = vrot.lane.b32.xlu0 %v925, 96
    %v939 = vpop.permute.xlu0 %938
    %940 = vrot.lane.b32.xlu0 %v926, 96
    %v941 = vpop.permute.xlu0 %940
    %v942 = vsel %vm502, %v939, 0
    %v944 = vsel %vm502, %v941, 0
    %946 = vmatprep.subr.mxu0 0.0
    %947 = vmatpush1.msra.mxu0 0.0
    %948 = vmatprep.subr.mxu0 0.0
    %949 = vmatpush1.msra.mxu0 0.0
    %950 = vmatprep.subr.mxu0 0.0
    %951 = vmatpush1.msra.mxu0 0.0
    %952 = vmatprep.subr.mxu0 0.0
    %953 = vmatpush1.msra.mxu0 0.0
    %954 = vmatprep.subr.mxu0 0.0
    %955 = vmatpush1.msra.mxu0 0.0
    %956 = vmatprep.subr.mxu0 0.0
    %957 = vmatpush1.msra.mxu0 0.0
    %958 = vmatprep.subr.mxu0 0.0
    %959 = vmatpush1.msra.mxu0 0.0
    %960 = vmatprep.subr.mxu0 0.0
    %961 = vmatpush1.msra.mxu0 0.0
    %962 = vmatprep.subr.mxu0 0.0
    %963 = vmatpush1.msra.mxu0 0.0
    %964 = vmatprep.subr.mxu0 0.0
    %965 = vmatpush1.msra.mxu0 0.0
    %966 = vmatprep.subr.mxu0 0.0
    %967 = vmatpush1.msra.mxu0 0.0
    %968 = vmatprep.subr.mxu0 0.0
    %969 = vmatpush1.msra.mxu0 0.0
    %970 = vmatprep.subr.mxu0 0.0
    %971 = vmatpush1.msra.mxu0 %v930
    %972 = vmatprep.subr.mxu0 0.0
    %973 = vmatpush1.msra.mxu0 %v929
    %974 = vmatprep.subr.mxu0 0.0
    %975 = vmatpush1.msra.mxu0 %v928
    %976 = vmatprep.subr.mxu0 0.0
    %977 = vmatpush1.msra.mxu0 %v927
    %978 = vmatprep.subr.mxu0 0.0
    %979 = vmatpush2.msra.mxu0 0.0
    %980 = vmatprep.subr.mxu0 0.0
    %981 = vmatpush2.msra.mxu0 0.0
    %982 = vmatprep.subr.mxu0 0.0
    %983 = vmatpush2.msra.mxu0 0.0
    %984 = vmatprep.subr.mxu0 0.0
    %985 = vmatpush2.msra.mxu0 0.0
    %986 = vmatprep.subr.mxu0 0.0
    %987 = vmatpush2.msra.mxu0 0.0
    %988 = vmatprep.subr.mxu0 0.0
    %989 = vmatpush2.msra.mxu0 0.0
    %990 = vmatprep.subr.mxu0 0.0
    %991 = vmatpush2.msra.mxu0 0.0
    %992 = vmatprep.subr.mxu0 0.0
    %993 = vmatpush2.msra.mxu0 0.0
    %994 = vmatprep.subr.mxu0 0.0
    %995 = vmatpush2.msra.mxu0 0.0
    %996 = vmatprep.subr.mxu0 0.0
    %997 = vmatpush2.msra.mxu0 0.0
    %998 = vmatprep.subr.mxu0 0.0
    %999 = vmatpush2.msra.mxu0 0.0
    %1000 = vmatprep.subr.mxu0 0.0
    %1001 = vmatpush2.msra.mxu0 0.0
    %1002 = vmatprep.subr.mxu0 0.0
    %1003 = vmatpush2.msra.mxu0 0.0
    %1004 = vmatprep.subr.mxu0 0.0
    %1005 = vmatpush2.msra.mxu0 0.0
    %1006 = vmatprep.subr.mxu0 0.0
    %1007 = vmatpush2.msra.mxu0 0.0
    %1008 = vmatprep.subr.mxu0 0.0
    %1009 = vmatpush2.msra.mxu0 0.0
    %1010 = vmatprep.mubr.f32.mxu0 0.0
    %1011 = vmatmul.mubr.f32.gmra.mxu0 %v942
    %v1012 = vpop.f32.mrf.mxu0
    %v1013 = vadd.f32 %v935, %v1012
    %v1014 = vpop.f32.mrf.mxu0
    %1015 = vmatprep.mubr.f32.mxu0 0.0
    %1016 = vmatmul.mubr.f32.gmra.mxu0 %v944
    %v1017 = vpop.f32.mrf.mxu0
    %v1018 = vadd.f32 %v935, %v1017
    %v1019 = vpop.f32.mrf.mxu0
    %1020 = vdwg.mxu0
    %v1021 = vsel %vm502, %v1013, 0.0
    %v1022 = vsel %vm502, %v1018, 0.0
    %v1023 = vadd.f32 %v1021, %v1022
    %v1024 = vrot.slane %v1023, 4
    %v1025 = vadd.f32 %v1023, %v1024
    %v1026 = vrot.slane %v1025, 2
    %v1027 = vadd.f32 %v1025, %v1026
    %v1028 = vrot.slane %v1027, 1
    %v1029 = vadd.f32 %v1027, %v1028
    %v1030 = vrcp.pop 16.0
    %v1031 = vmul.f32 %v1029, %v1030
    %v1032 = vsub.f32 %v1013, %v1031
    %v1033 = vsub.f32 %v1018, %v1031
    %v1034 = vmul.f32 %v1032, %v1032
    %v1035 = vmul.f32 %v1033, %v1033
    %v1036 = vsel %vm502, %v1034, 0.0
    %v1037 = vsel %vm502, %v1035, 0.0
    %v1038 = vadd.f32 %v1036, %v1037
    %v1039 = vrot.slane %v1038, 4
    %v1040 = vadd.f32 %v1038, %v1039
    %v1041 = vrot.slane %v1040, 2
    %v1042 = vadd.f32 %v1040, %v1041
    %v1043 = vrot.slane %v1042, 1
    %v1044 = vadd.f32 %v1042, %v1043
    %v1045 = vmul.f32 %v1044, %v1030
    %v1046 = vadd.f32 %v1045, 1e-05
    %v1047 = vrsqrt.pop %v1046
    %v1048 = vmul.f32 %v1032, %v1047
    %v1049 = vmul.f32 %v1033, %v1047
    %v1050 = vld [vmem:[%s11 + $0x4] sm:$0x1]
    %v1051 = vlaneseq
    %v1052 = vshrl.u32 %v1051, 7
    %v1053 = vsub.s32 0, %v1052
    %v1054 = vrot.slane %v1050, %v1053
    %v1055 = vmul.f32 %v1048, %v1054
    %v1056 = vmul.f32 %v1049, %v1054
    %v1057 = vld [vmem:[%s11 + $0x5] sm:$0x1]
    %v1058 = vlaneseq
    %v1059 = vshrl.u32 %v1058, 7
    %v1060 = vsub.s32 0, %v1059
    %v1061 = vrot.slane %v1057, %v1060
    %v1062 = vadd.f32 %v1055, %v1061
    %v1063 = vadd.f32 %v1056, %v1061
    %vm1064 = vcmp.gt.f32.partialorder %v1062, 0.0
    %vm1065 = vcmp.gt.f32.partialorder %v1063, 0.0
    %v1066 = vmul.f32 %v1062, 0.01
    %v1067 = vmul.f32 %v1063, 0.01
    %v1068 = vsel %vm1064, %v1062, %v1066
    %v1069 = vsel %vm1065, %v1063, %v1067
    %1070 = vrot.lane.b32.xlu0 %v58, 32
    %v1071 = vpop.permute.xlu0 %1070
    %1072 = vrot.lane.b32.xlu0 %v59, 32
    %v1073 = vpop.permute.xlu0 %1072
    %v1076 = vsel %vm502, %v1068, %v1071
    %v1077 = vsel %vm502, %v1069, %v1073
    %v1078 = vld [vmem:[%s8] sm:$0xff]
    %v1079 = vld [vmem:[%s8 + $0x8] sm:$0xff]
    %v1080 = vld [vmem:[%s8 + $0x10] sm:$0xff]
    %v1081 = vld [vmem:[%s8 + $0x18] sm:$0xff]
    %v1082 = vld [vmem:[%s8 + $0x20] sm:$0xff]
    %v1083 = vld [vmem:[%s8 + $0x28] sm:$0xff]
    %v1084 = vld [vmem:[%s8 + $0x30] sm:$0xff]
    %v1085 = vld [vmem:[%s8 + $0x38] sm:$0xff]
    %v1086 = vld [vmem:[%s11 + $0x6] sm:$0x1]
    %v1087 = vlaneseq
    %v1088 = vshrl.u32 %v1087, 7
    %v1089 = vsub.s32 0, %v1088
    %v1090 = vrot.slane %v1086, %v1089
    %v1092 = vsel %vm789, %v1076, 0
    %v1095 = vsel %vm789, %v1077, 0
    %1097 = vmatprep.subr.mxu0 0.0
    %1098 = vmatpush1.msra.mxu0 0.0
    %1099 = vmatprep.subr.mxu0 0.0
    %1100 = vmatpush1.msra.mxu0 0.0
    %1101 = vmatprep.subr.mxu0 0.0
    %1102 = vmatpush1.msra.mxu0 0.0
    %1103 = vmatprep.subr.mxu0 0.0
    %1104 = vmatpush1.msra.mxu0 0.0
    %1105 = vmatprep.subr.mxu0 0.0
    %1106 = vmatpush1.msra.mxu0 0.0
    %1107 = vmatprep.subr.mxu0 0.0
    %1108 = vmatpush1.msra.mxu0 0.0
    %1109 = vmatprep.subr.mxu0 0.0
    %1110 = vmatpush1.msra.mxu0 0.0
    %1111 = vmatprep.subr.mxu0 0.0
    %1112 = vmatpush1.msra.mxu0 0.0
    %1113 = vmatprep.subr.mxu0 0.0
    %1114 = vmatpush1.msra.mxu0 %v1085
    %1115 = vmatprep.subr.mxu0 0.0
    %1116 = vmatpush1.msra.mxu0 %v1084
    %1117 = vmatprep.subr.mxu0 0.0
    %1118 = vmatpush1.msra.mxu0 %v1083
    %1119 = vmatprep.subr.mxu0 0.0
    %1120 = vmatpush1.msra.mxu0 %v1082
    %1121 = vmatprep.subr.mxu0 0.0
    %1122 = vmatpush1.msra.mxu0 %v1081
    %1123 = vmatprep.subr.mxu0 0.0
    %1124 = vmatpush1.msra.mxu0 %v1080
    %1125 = vmatprep.subr.mxu0 0.0
    %1126 = vmatpush1.msra.mxu0 %v1079
    %1127 = vmatprep.subr.mxu0 0.0
    %1128 = vmatpush1.msra.mxu0 %v1078
    %1129 = vmatprep.subr.mxu0 0.0
    %1130 = vmatpush2.msra.mxu0 0.0
    %1131 = vmatprep.subr.mxu0 0.0
    %1132 = vmatpush2.msra.mxu0 0.0
    %1133 = vmatprep.subr.mxu0 0.0
    %1134 = vmatpush2.msra.mxu0 0.0
    %1135 = vmatprep.subr.mxu0 0.0
    %1136 = vmatpush2.msra.mxu0 0.0
    %1137 = vmatprep.subr.mxu0 0.0
    %1138 = vmatpush2.msra.mxu0 0.0
    %1139 = vmatprep.subr.mxu0 0.0
    %1140 = vmatpush2.msra.mxu0 0.0
    %1141 = vmatprep.subr.mxu0 0.0
    %1142 = vmatpush2.msra.mxu0 0.0
    %1143 = vmatprep.subr.mxu0 0.0
    %1144 = vmatpush2.msra.mxu0 0.0
    %1145 = vmatprep.subr.mxu0 0.0
    %1146 = vmatpush2.msra.mxu0 0.0
    %1147 = vmatprep.subr.mxu0 0.0
    %1148 = vmatpush2.msra.mxu0 0.0
    %1149 = vmatprep.subr.mxu0 0.0
    %1150 = vmatpush2.msra.mxu0 0.0
    %1151 = vmatprep.subr.mxu0 0.0
    %1152 = vmatpush2.msra.mxu0 0.0
    %1153 = vmatprep.subr.mxu0 0.0
    %1154 = vmatpush2.msra.mxu0 0.0
    %1155 = vmatprep.subr.mxu0 0.0
    %1156 = vmatpush2.msra.mxu0 0.0
    %1157 = vmatprep.subr.mxu0 0.0
    %1158 = vmatpush2.msra.mxu0 0.0
    %1159 = vmatprep.subr.mxu0 0.0
    %1160 = vmatpush2.msra.mxu0 0.0
    %1161 = vmatprep.mubr.f32.mxu0 0.0
    %1162 = vmatmul.mubr.f32.gmra.mxu0 %v1092
    %v1163 = vpop.f32.mrf.mxu0
    %v1164 = vadd.f32 %v1090, %v1163
    %v1165 = vpop.f32.mrf.mxu0
    %1166 = vmatprep.mubr.f32.mxu0 0.0
    %1167 = vmatmul.mubr.f32.gmra.mxu0 %v1095
    %v1168 = vpop.f32.mrf.mxu0
    %v1169 = vadd.f32 %v1090, %v1168
    %v1170 = vpop.f32.mrf.mxu0
    %1171 = vdwg.mxu0
    %v1172 = vxor.u32 %v1164, 2147483648
    %v1173 = vxor.u32 %v1169, 2147483648
    %v1174 = vmul.f32 %v1172, 1.442695
    %v1175 = vpow.pop %v1174
    %v1176 = vmul.f32 %v1173, 1.442695
    %v1177 = vpow.pop %v1176
    %v1178 = vadd.f32 %v1175, 1.0
    %v1179 = vadd.f32 %v1177, 1.0
    %v1180 = vrcp.pop %v1178
    %v1181 = vmul.f32 1.0, %v1180
    %v1182 = vrcp.pop %v1179
    %v1183 = vmul.f32 1.0, %v1182
    %1186 = vrot.lane.b32.xlu0 %v1164, 32
    %v1187 = vpop.permute.xlu0 %1186
    %1188 = vrot.lane.b32.xlu0 %v1169, 32
    %v1189 = vpop.permute.xlu0 %1188
    %v1192 = vmul.f32 %v1181, %v1187
    %v1193 = vmul.f32 %v1183, %v1189
    %1196 = vrot.lane.b32.xlu0 %v1192, 64
    %v1197 = vpop.permute.xlu0 %1196
    %1198 = vrot.lane.b32.xlu0 %v1193, 64
    %v1199 = vpop.permute.xlu0 %1198
    %v1202 = vadd.f32 %v1164, %v1197
    %v1203 = vadd.f32 %v1169, %v1199
    %v1204 = vtanh.pop %v1202
    %v1205 = vtanh.pop %v1203
    %v1206 = vsub.f32 1.0, %v1181
    %v1207 = vsub.f32 1.0, %v1183
    %1210 = vrot.lane.b32.xlu0 %v1204, 96
    %v1211 = vpop.permute.xlu0 %1210
    %1212 = vrot.lane.b32.xlu0 %v1205, 96
    %v1213 = vpop.permute.xlu0 %1212
    %v1216 = vmul.f32 %v1206, %v1211
    %v1217 = vmul.f32 %v1207, %v1213
    %v1218 = vmul.f32 %v1181, %v1071
    %v1219 = vmul.f32 %v1183, %v1073
    %v1220 = vadd.f32 %v1216, %v1218
    %v1221 = vadd.f32 %v1217, %v1219
    %v1222 = vld [vmem:[%s9] sm:$0xff]
    %v1223 = vld [vmem:[%s9 + $0x8] sm:$0xff]
    %v1224 = vld [vmem:[%s9 + $0x10] sm:$0xff]
    %v1225 = vld [vmem:[%s9 + $0x18] sm:$0xff]
    %v1226 = vld [vmem:[%s11 + $0x7] sm:$0x1]
    %v1227 = vlaneseq
    %v1228 = vshrl.u32 %v1227, 7
    %v1229 = vsub.s32 0, %v1228
    %v1230 = vrot.slane %v1226, %v1229
    %1233 = vrot.lane.b32.xlu0 %v1220, 96
    %v1234 = vpop.permute.xlu0 %1233
    %1235 = vrot.lane.b32.xlu0 %v1221, 96
    %v1236 = vpop.permute.xlu0 %1235
    %v1237 = vsel %vm502, %v1234, 0
    %v1239 = vsel %vm502, %v1236, 0
    %1241 = vmatprep.subr.mxu0 0.0
    %1242 = vmatpush1.msra.mxu0 0.0
    %1243 = vmatprep.subr.mxu0 0.0
    %1244 = vmatpush1.msra.mxu0 0.0
    %1245 = vmatprep.subr.mxu0 0.0
    %1246 = vmatpush1.msra.mxu0 0.0
    %1247 = vmatprep.subr.mxu0 0.0
    %1248 = vmatpush1.msra.mxu0 0.0
    %1249 = vmatprep.subr.mxu0 0.0
    %1250 = vmatpush1.msra.mxu0 0.0
    %1251 = vmatprep.subr.mxu0 0.0
    %1252 = vmatpush1.msra.mxu0 0.0
    %1253 = vmatprep.subr.mxu0 0.0
    %1254 = vmatpush1.msra.mxu0 0.0
    %1255 = vmatprep.subr.mxu0 0.0
    %1256 = vmatpush1.msra.mxu0 0.0
    %1257 = vmatprep.subr.mxu0 0.0
    %1258 = vmatpush1.msra.mxu0 0.0
    %1259 = vmatprep.subr.mxu0 0.0
    %1260 = vmatpush1.msra.mxu0 0.0
    %1261 = vmatprep.subr.mxu0 0.0
    %1262 = vmatpush1.msra.mxu0 0.0
    %1263 = vmatprep.subr.mxu0 0.0
    %1264 = vmatpush1.msra.mxu0 0.0
    %1265 = vmatprep.subr.mxu0 0.0
    %1266 = vmatpush1.msra.mxu0 %v1225
    %1267 = vmatprep.subr.mxu0 0.0
    %1268 = vmatpush1.msra.mxu0 %v1224
    %1269 = vmatprep.subr.mxu0 0.0
    %1270 = vmatpush1.msra.mxu0 %v1223
    %1271 = vmatprep.subr.mxu0 0.0
    %1272 = vmatpush1.msra.mxu0 %v1222
    %1273 = vmatprep.subr.mxu0 0.0
    %1274 = vmatpush2.msra.mxu0 0.0
    %1275 = vmatprep.subr.mxu0 0.0
    %1276 = vmatpush2.msra.mxu0 0.0
    %1277 = vmatprep.subr.mxu0 0.0
    %1278 = vmatpush2.msra.mxu0 0.0
    %1279 = vmatprep.subr.mxu0 0.0
    %1280 = vmatpush2.msra.mxu0 0.0
    %1281 = vmatprep.subr.mxu0 0.0
    %1282 = vmatpush2.msra.mxu0 0.0
    %1283 = vmatprep.subr.mxu0 0.0
    %1284 = vmatpush2.msra.mxu0 0.0
    %1285 = vmatprep.subr.mxu0 0.0
    %1286 = vmatpush2.msra.mxu0 0.0
    %1287 = vmatprep.subr.mxu0 0.0
    %1288 = vmatpush2.msra.mxu0 0.0
    %1289 = vmatprep.subr.mxu0 0.0
    %1290 = vmatpush2.msra.mxu0 0.0
    %1291 = vmatprep.subr.mxu0 0.0
    %1292 = vmatpush2.msra.mxu0 0.0
    %1293 = vmatprep.subr.mxu0 0.0
    %1294 = vmatpush2.msra.mxu0 0.0
    %1295 = vmatprep.subr.mxu0 0.0
    %1296 = vmatpush2.msra.mxu0 0.0
    %1297 = vmatprep.subr.mxu0 0.0
    %1298 = vmatpush2.msra.mxu0 0.0
    %1299 = vmatprep.subr.mxu0 0.0
    %1300 = vmatpush2.msra.mxu0 0.0
    %1301 = vmatprep.subr.mxu0 0.0
    %1302 = vmatpush2.msra.mxu0 0.0
    %1303 = vmatprep.subr.mxu0 0.0
    %1304 = vmatpush2.msra.mxu0 0.0
    %1305 = vmatprep.mubr.f32.mxu0 0.0
    %1306 = vmatmul.mubr.f32.gmra.mxu0 %v1237
    %v1307 = vpop.f32.mrf.mxu0
    %v1308 = vadd.f32 %v1230, %v1307
    %v1309 = vpop.f32.mrf.mxu0
    %1310 = vmatprep.mubr.f32.mxu0 0.0
    %1311 = vmatmul.mubr.f32.gmra.mxu0 %v1239
    %v1312 = vpop.f32.mrf.mxu0
    %v1313 = vadd.f32 %v1230, %v1312
    %v1314 = vpop.f32.mrf.mxu0
    %1315 = vdwg.mxu0
    %v1316 = vsel %vm502, %v1308, 0.0
    %v1317 = vsel %vm502, %v1313, 0.0
    %v1318 = vadd.f32 %v1316, %v1317
    %v1319 = vrot.slane %v1318, 4
    %v1320 = vadd.f32 %v1318, %v1319
    %v1321 = vrot.slane %v1320, 2
    %v1322 = vadd.f32 %v1320, %v1321
    %v1323 = vrot.slane %v1322, 1
    %v1324 = vadd.f32 %v1322, %v1323
    %v1325 = vmul.f32 %v1324, %v1030
    %v1326 = vsub.f32 %v1308, %v1325
    %v1327 = vsub.f32 %v1313, %v1325
    %v1328 = vmul.f32 %v1326, %v1326
    %v1329 = vmul.f32 %v1327, %v1327
    %v1330 = vsel %vm502, %v1328, 0.0
    %v1331 = vsel %vm502, %v1329, 0.0
    %v1332 = vadd.f32 %v1330, %v1331
    %v1333 = vrot.slane %v1332, 4
    %v1334 = vadd.f32 %v1332, %v1333
    %v1335 = vrot.slane %v1334, 2
    %v1336 = vadd.f32 %v1334, %v1335
    %v1337 = vrot.slane %v1336, 1
    %v1338 = vadd.f32 %v1336, %v1337
    %v1339 = vmul.f32 %v1338, %v1030
    %v1340 = vadd.f32 %v1339, 1e-05
    %v1341 = vrsqrt.pop %v1340
    %v1342 = vmul.f32 %v1326, %v1341
    %v1343 = vmul.f32 %v1327, %v1341
    %v1344 = vld [vmem:[%s11 + $0x8] sm:$0x1]
    %v1345 = vlaneseq
    %v1346 = vshrl.u32 %v1345, 7
    %v1347 = vsub.s32 0, %v1346
    %v1348 = vrot.slane %v1344, %v1347
    %v1349 = vmul.f32 %v1342, %v1348
    %v1350 = vmul.f32 %v1343, %v1348
    %v1351 = vld [vmem:[%s11 + $0x9] sm:$0x1]
    %v1352 = vlaneseq
    %v1353 = vshrl.u32 %v1352, 7
    %v1354 = vsub.s32 0, %v1353
    %v1355 = vrot.slane %v1351, %v1354
    %v1356 = vadd.f32 %v1349, %v1355
    %v1357 = vadd.f32 %v1350, %v1355
    %v1358 = vmax.f32 %v1356, 0.0
    %v1359 = vmax.f32 %v1357, 0.0
    %v1360 = vld [vmem:[%s10] sm:$0xff]
    %v1361 = vld [vmem:[%s10 + $0x8] sm:$0xff]
    %v1362 = vld [vmem:[%s10 + $0x10] sm:$0xff]
    %v1363 = vld [vmem:[%s10 + $0x18] sm:$0xff]
    %v1364 = vld [vmem:[%s11 + $0xa] sm:$0x1]
    %v1365 = vlaneseq
    %v1366 = vshrl.u32 %v1365, 7
    %v1367 = vsub.s32 0, %v1366
    %v1368 = vrot.slane %v1364, %v1367
    %v1370 = vsel %vm502, %v1358, 0
    %v1373 = vsel %vm502, %v1359, 0
    %1375 = vmatprep.subr.mxu0 0.0
    %1376 = vmatpush1.msra.mxu0 0.0
    %1377 = vmatprep.subr.mxu0 0.0
    %1378 = vmatpush1.msra.mxu0 0.0
    %1379 = vmatprep.subr.mxu0 0.0
    %1380 = vmatpush1.msra.mxu0 0.0
    %1381 = vmatprep.subr.mxu0 0.0
    %1382 = vmatpush1.msra.mxu0 0.0
    %1383 = vmatprep.subr.mxu0 0.0
    %1384 = vmatpush1.msra.mxu0 0.0
    %1385 = vmatprep.subr.mxu0 0.0
    %1386 = vmatpush1.msra.mxu0 0.0
    %1387 = vmatprep.subr.mxu0 0.0
    %1388 = vmatpush1.msra.mxu0 0.0
    %1389 = vmatprep.subr.mxu0 0.0
    %1390 = vmatpush1.msra.mxu0 0.0
    %1391 = vmatprep.subr.mxu0 0.0
    %1392 = vmatpush1.msra.mxu0 0.0
    %1393 = vmatprep.subr.mxu0 0.0
    %1394 = vmatpush1.msra.mxu0 0.0
    %1395 = vmatprep.subr.mxu0 0.0
    %1396 = vmatpush1.msra.mxu0 0.0
    %1397 = vmatprep.subr.mxu0 0.0
    %1398 = vmatpush1.msra.mxu0 0.0
    %1399 = vmatprep.subr.mxu0 0.0
    %1400 = vmatpush1.msra.mxu0 %v1363
    %1401 = vmatprep.subr.mxu0 0.0
    %1402 = vmatpush1.msra.mxu0 %v1362
    %1403 = vmatprep.subr.mxu0 0.0
    %1404 = vmatpush1.msra.mxu0 %v1361
    %1405 = vmatprep.subr.mxu0 0.0
    %1406 = vmatpush1.msra.mxu0 %v1360
    %1407 = vmatprep.subr.mxu0 0.0
    %1408 = vmatpush2.msra.mxu0 0.0
    %1409 = vmatprep.subr.mxu0 0.0
    %1410 = vmatpush2.msra.mxu0 0.0
    %1411 = vmatprep.subr.mxu0 0.0
    %1412 = vmatpush2.msra.mxu0 0.0
    %1413 = vmatprep.subr.mxu0 0.0
    %1414 = vmatpush2.msra.mxu0 0.0
    %1415 = vmatprep.subr.mxu0 0.0
    %1416 = vmatpush2.msra.mxu0 0.0
    %1417 = vmatprep.subr.mxu0 0.0
    %1418 = vmatpush2.msra.mxu0 0.0
    %1419 = vmatprep.subr.mxu0 0.0
    %1420 = vmatpush2.msra.mxu0 0.0
    %1421 = vmatprep.subr.mxu0 0.0
    %1422 = vmatpush2.msra.mxu0 0.0
    %1423 = vmatprep.subr.mxu0 0.0
    %1424 = vmatpush2.msra.mxu0 0.0
    %1425 = vmatprep.subr.mxu0 0.0
    %1426 = vmatpush2.msra.mxu0 0.0
    %1427 = vmatprep.subr.mxu0 0.0
    %1428 = vmatpush2.msra.mxu0 0.0
    %1429 = vmatprep.subr.mxu0 0.0
    %1430 = vmatpush2.msra.mxu0 0.0
    %1431 = vmatprep.subr.mxu0 0.0
    %1432 = vmatpush2.msra.mxu0 0.0
    %1433 = vmatprep.subr.mxu0 0.0
    %1434 = vmatpush2.msra.mxu0 0.0
    %1435 = vmatprep.subr.mxu0 0.0
    %1436 = vmatpush2.msra.mxu0 0.0
    %1437 = vmatprep.subr.mxu0 0.0
    %1438 = vmatpush2.msra.mxu0 0.0
    %1439 = vmatprep.mubr.f32.mxu0 0.0
    %1440 = vmatmul.mubr.f32.gmra.mxu0 %v1370
    %v1441 = vpop.f32.mrf.mxu0
    %v1442 = vadd.f32 %v1368, %v1441
    %v1443 = vpop.f32.mrf.mxu0
    %1444 = vmatprep.mubr.f32.mxu0 0.0
    %1445 = vmatmul.mubr.f32.gmra.mxu0 %v1373
    %v1446 = vpop.f32.mrf.mxu0
    %v1447 = vadd.f32 %v1368, %v1446
    %v1448 = vpop.f32.mrf.mxu0
    %1449 = vdwg.mxu0
    %v1450 = vadd.f32 %v1442, %v492
    %v1451 = vadd.f32 %v1447, %v493
    %v1452 = vmul.f32 %v1450, 0.05
    %v1453 = vmul.f32 %v1451, 0.05
    %v1454 = vadd.f32 %v60, %v1452
    %v1455 = vadd.f32 %v61, %v1453
    %s1456 = smul.u32 %s53, 16
    %s1457 = scalar_lea.vmem %s12, %s1456
    %1458 = vst.msk [vmem:[%s1457] sm:$0xff] %vm602, %v1454
    %1459 = vst.msk [vmem:[%s1457 + $0x8] sm:$0xff] %vm602, %v1455
  $region54: #{_lambda_.1} parent=0 // loop_footer
    %s57 = sadd.s32 1, %s53
  $region55: #{_lambda_.1} parent=0 // loop_footer_branch
    %52 = sbr.rel target = $region51
  $region56: #{_lambda_.1} parent=0 // loop_exit
    _
  // Predicated region
  $region57: #{_lambda_.1} parent=0 // pred_check
    _
  $region58: #{_lambda_.1} parent=0 // pred_check_branch
    %1463 = sbr.rel (0) target = $region60
  $region59: #{_lambda_.1} parent=0 // pred_region
    _
  $region60: #{_lambda_.1} parent=0 // pred_fallthru
    _
  // Predicated region
  $region61: #{_lambda_.1} parent=0 // pred_check
    _
  $region62: #{_lambda_.1} parent=0 // pred_check_branch
    %1465 = sbr.rel (0) target = $region64
  $region63: #{_lambda_.1} parent=0 // pred_region
    _
  $region64: #{_lambda_.1} parent=0 // pred_fallthru
    _

</llo_original>
